<compile_context>
chip_gen: v5e
topology: v5e:2x2
jax: 0.10.0
libtpu: 0.0.40
codegen_flags: <defaults>
</compile_context>

<pallas_src>
import functools

import jax
import jax.numpy as jnp
from jax.experimental import pallas as pl
from jax.experimental.pallas import tpu as pltpu  # noqa: F401  (TPU backend assumed)

LANE = 128


# -----------------------------------------------------------------------------
# Fused kernel: GPT trunk + cbet head + sampling + losses (single invocation)
# -----------------------------------------------------------------------------
def _make_bet_kernel(n, t, e_dim, out_dim, act_dim, k_clusters, gamma,
                     predict_with_offset):
    m = n * t
    inv_e = 1.0 / float(e_dim)
    att_scale = 1.0 / (float(e_dim) ** 0.5)
    f32 = jnp.float32
    bf16 = jnp.bfloat16

    def kernel(obs_ref, wall_ref, bias_ref, centers_ref, act_ref, upad_ref,
               ahat_ref, sums_ref):
        # ---- small helpers -------------------------------------------------
        def row(i):                       # (1,128) bias / LN-param row
            return bias_ref[i:i + 1, :]

        def wslab(i, nblk=1):             # (128, nblk*128) bf16 weight slab
            return wall_ref[:, i * LANE:(i + nblk) * LANE]

        def mm(a, w):                     # bf16 MXU matmul, f32 accumulate
            return jnp.dot(a.astype(bf16), w, preferred_element_type=f32)

        lane_row = jax.lax.broadcasted_iota(jnp.int32, (1, LANE), 1)
        feat_mask = (lane_row < e_dim).astype(f32)

        def layernorm(z, gi, bi):
            # real features live in lanes [0, e_dim); padded lanes of z are 0.
            mean = jnp.sum(z, axis=-1, keepdims=True) * inv_e
            zc = z - mean
            var = jnp.sum(zc * zc * feat_mask, axis=-1, keepdims=True) * inv_e
            # padded lanes: gamma = beta = 0  ->  output stays exactly 0.
            return zc * jax.lax.rsqrt(var + 1e-5) * row(gi) + row(bi)

        x = obs_ref[...]                  # (m,128) f32, lanes >= obs_dim are 0
        centers = centers_ref[...]        # (128,128) f32, [k<K, a<A] valid
        act = act_ref[...]                # (m,128) f32, lanes >= A are 0
        upad = upad_ref[...]              # (m,128) f32, lane0 = u, lane1 = pad

        # ---- GPT trunk: embed -> causal attn -> GELU MLP -> LN -> head -----
        h = mm(x, wslab(0)) + row(0)                       # (m,128), lanes<E

        hn = layernorm(h, 1, 2)
        qkv = mm(hn, wslab(1, 3))                          # fused QKV (m,384)
        q = qkv[:, 0:LANE].reshape(n, t, LANE)
        k_ = qkv[:, LANE:2 * LANE].reshape(n, t, LANE)
        v = qkv[:, 2 * LANE:3 * LANE].reshape(n, t, LANE)

        scores = jnp.einsum('nqe,nke->nqk', q.astype(bf16), k_.astype(bf16),
                            preferred_element_type=f32) * att_scale
        ti = jax.lax.broadcasted_iota(jnp.int32, (n, t, t), 1)
        tj = jax.lax.broadcasted_iota(jnp.int32, (n, t, t), 2)
        scores = jnp.where(tj <= ti, scores, -1e30)        # causal mask
        scores = scores - jnp.max(scores, axis=-1, keepdims=True)
        p_att = jnp.exp(scores)
        p_att = p_att * pl.reciprocal(jnp.sum(p_att, axis=-1, keepdims=True),
                                      approx=True)
        y = jnp.einsum('nqk,nke->nqe', p_att.astype(bf16), v.astype(bf16),
                       preferred_element_type=f32).reshape(m, LANE)
        h = h + mm(y, wslab(4))

        hn = layernorm(h, 3, 4)
        mlp = jax.nn.gelu(mm(hn, wslab(5)) + row(7), approximate=True)
        h = h + mm(mlp, wslab(6)) + row(8)

        hf = layernorm(h, 5, 6)
        g = mm(hf, wslab(7)) + row(9)                      # (m,128), lanes<O

        # _map_to_cbet_preds (single Linear), split into logits / offsets slabs
        logits = mm(g, wslab(8)) + row(10)                 # lanes < K valid
        offs = mm(g, wslab(9)) + row(11)                   # lanes < K*A valid

        # ---- cluster softmax + inverse-CDF categorical sample --------------
        klane = jax.lax.broadcasted_iota(jnp.int32, (m, LANE), 1)
        lg = jnp.where(klane < k_clusters, logits, jnp.float32(-1e30))
        z = lg - jnp.max(lg, axis=-1, keepdims=True)
        ez = jnp.exp(z)
        denom = jnp.sum(ez, axis=-1, keepdims=True)
        probs = ez * pl.reciprocal(denom, approx=True)

        rr = jax.lax.broadcasted_iota(jnp.int32, (LANE, LANE), 0)
        cc = jax.lax.broadcasted_iota(jnp.int32, (LANE, LANE), 1)
        tri = (rr <= cc).astype(f32)                       # CDF via MXU
        cdf = jnp.dot(probs, tri, preferred_element_type=f32)
        u = upad[:, 0:1]
        s_idx = jnp.minimum(
            jnp.sum((cdf < u).astype(jnp.int32), axis=-1, keepdims=True),
            k_clusters - 1)                                # (m,1)

        # selection matrix: sel[r, c] = 1  iff  r mod A == c (for c < A)
        rr_f = rr.astype(f32)
        cc_f = cc.astype(f32)
        rmod = rr_f - float(act_dim) * jnp.floor(rr_f / float(act_dim))
        sel_mat = (rmod == cc_f).astype(f32)               # (128,128)

        onehot_s = (klane == s_idx).astype(f32)
        lo_s = s_idx * act_dim
        exp_s = ((klane >= lo_s) & (klane < lo_s + act_dim)).astype(f32)
        sampled_ctr = jnp.dot(onehot_s, centers, preferred_element_type=f32)
        sampled_off = jnp.dot(offs * exp_s, sel_mat, preferred_element_type=f32)
        a_hat = (sampled_ctr + sampled_off) if predict_with_offset else sampled_ctr
        ahat_ref[...] = a_hat                              # lane-dense store

        # ---- losses ----------------------------------------------------------
        # closest cluster: argmin_k |a - c_k|^2  (|a|^2 constant per row)
        cross = jnp.einsum('ma,ka->mk', act, centers,
                           preferred_element_type=f32)     # (m,128)
        csq = jnp.einsum('ra,ka->rk', jnp.ones((1, LANE), f32),
                         centers * centers, preferred_element_type=f32)  # (1,128)
        dist = jnp.where(lane_row < k_clusters, csq - 2.0 * cross,
                         jnp.float32(1e30))
        dmin = jnp.min(dist, axis=-1, keepdims=True)
        bin_idx = jnp.min(jnp.where(dist <= dmin, klane, LANE),
                          axis=-1, keepdims=True)          # first argmin, (m,1)
        onehot_b = (klane == bin_idx).astype(f32)
        lo_b = bin_idx * act_dim
        exp_b = ((klane >= lo_b) & (klane < lo_b + act_dim)).astype(f32)

        true_off = act - jnp.dot(onehot_b, centers, preferred_element_type=f32)
        pred_off = jnp.dot(offs * exp_b, sel_mat, preferred_element_type=f32)
        offset_err = (pred_off - true_off) ** 2            # MSE, reduction='none'

        # FocalLoss(gamma, reduction='none') on the action-bin targets
        logp = z - jnp.log(denom)                          # exact log_softmax
        logpt = jnp.sum(onehot_b * logp, axis=-1, keepdims=True)
        pt = jnp.minimum(jnp.exp(logpt), 1.0)
        if gamma == 2.0:
            focal_w = (1.0 - pt) * (1.0 - pt)
        elif gamma == 0.0:
            focal_w = jnp.ones_like(pt)
        else:
            focal_w = (1.0 - pt) ** gamma
        cbet_err = -focal_w * logpt                        # (m,1)

        # padding mask (cbet *= ~pad ; offset *= ~pad[..., None])
        notpad = 1.0 - upad[:, 1:2]
        cbet_err = cbet_err * notpad
        offset_err = offset_err * notpad

        # action regression metrics (unmasked, as in the reference)
        diff = a_hat - act
        amse = diff * diff
        al1 = jnp.abs(diff)
        norm = jnp.sqrt(jnp.sum(act * act, axis=-1, keepdims=True)) + 1e-9
        nmse = amse / norm

        def total(vv):                                     # -> (1,1) scalar sum
            return jnp.sum(jnp.sum(vv, axis=-1, keepdims=True),
                           axis=0, keepdims=True)

        sums = jnp.where(lane_row == 0, total(cbet_err), 0.0)
        sums = sums + jnp.where(lane_row == 1, total(offset_err), 0.0)
        sums = sums + jnp.where(lane_row == 2, total(amse), 0.0)
        sums = sums + jnp.where(lane_row == 3, total(al1), 0.0)
        sums = sums + jnp.where(lane_row == 4, total(nmse), 0.0)
        sums_ref[...] = sums

    return kernel


# -----------------------------------------------------------------------------
# Jitted forward: pad/pack inputs, one pallas_call, scalar loss assembly
# -----------------------------------------------------------------------------
@functools.partial(
    jax.jit,
    static_argnames=("n", "t", "obs_dim", "act_dim", "n_embd", "gpt_output_dim",
                     "k", "gamma", "offset_mult", "predict_with_offset"))
def _bet_forward(w_all, bias_all, centers_p, obs_seq, action_seq, padding_seq, u,
                 *, n, t, obs_dim, act_dim, n_embd, gpt_output_dim, k, gamma,
                 offset_mult, predict_with_offset):
    m = n * t
    obs_p = jnp.zeros((m, LANE), jnp.float32).at[:, :obs_dim].set(
        obs_seq.reshape(m, obs_dim).astype(jnp.float32))
    act_p = jnp.zeros((m, LANE), jnp.float32).at[:, :act_dim].set(
        action_seq.reshape(m, act_dim).astype(jnp.float32))
    upad = (jnp.zeros((m, LANE), jnp.float32)
            .at[:, 0].set(u.reshape(m).astype(jnp.float32))
            .at[:, 1].set(padding_seq.reshape(m).astype(jnp.float32)))

    kernel = _make_bet_kernel(n, t, n_embd, gpt_output_dim, act_dim, k, gamma,
                              predict_with_offset)
    ahat_pad, sums = pl.pallas_call(
        kernel,
        out_shape=(jax.ShapeDtypeStruct((m, LANE), jnp.float32),   # a_hat slab
                   jax.ShapeDtypeStruct((1, LANE), jnp.float32)),  # loss sums
    )(obs_p, w_all, bias_all, centers_p, act_p, upad)

    a_hat = ahat_pad[:, :act_dim].reshape(n, t, act_dim)
    s = sums[0]
    nt = float(m)
    nta = float(m * act_dim)
    cbet_loss = s[0] / nt
    offset_loss = s[1] / nta
    loss = cbet_loss + offset_mult * offset_loss
    scalars = jnp.stack([cbet_loss, offset_loss, loss,
                         s[2] / nta, s[4] / nta, s[3] / nta])
    return a_hat, loss, scalars


# -----------------------------------------------------------------------------
# BehaviorTransformer wrapper: parameter construction / packing, loss dict
# -----------------------------------------------------------------------------
class BehaviorTransformerPallas:
    def __init__(self, obs_dim, act_dim, goal_dim=0, n_embd=32, gpt_output_dim=32,
                 n_clusters=8, gamma=2.0, offset_loss_multiplier=1000.0, seed=1234):
        assert goal_dim <= 0, "this synthetic config uses the 'unconditional' goal spec"
        assert obs_dim <= LANE and n_embd <= LANE and 4 * n_embd <= LANE
        assert gpt_output_dim <= LANE and n_clusters <= LANE
        assert n_clusters * act_dim <= LANE
        self.obs_dim, self.act_dim, self.K = obs_dim, act_dim, n_clusters
        self.n_embd, self.gpt_output_dim = n_embd, gpt_output_dim
        self.gamma = float(gamma)
        self.offset_loss_multiplier = float(offset_loss_multiplier)

        key = jax.random.PRNGKey(seed)
        ks = jax.random.split(key, 12)
        E, O = n_embd, gpt_output_dim

        def lin(kk, fi, fo):
            return (0.02 * jax.random.normal(kk, (fi, fo))).astype(jnp.float32)

        We = lin(ks[0], obs_dim, E)
        Wq = lin(ks[1], E, E); Wk = lin(ks[2], E, E)
        Wv = lin(ks[3], E, E); Wo = lin(ks[4], E, E)
        W1 = lin(ks[5], E, 4 * E); W2 = lin(ks[6], 4 * E, E)
        Wh = lin(ks[7], E, O)
        cbet_out = (act_dim + 1) * n_clusters
        Wc = lin(ks[8], O, cbet_out)
        # register_buffer('_cluster_centers', randn(K, act_dim))
        cluster_centers = jax.random.normal(ks[9], (n_clusters, act_dim),
                                            dtype=jnp.float32)
        # nn.Parameter(randn(obs_dim)) — unused here (obs_T == actions_to_predict)
        self.obs_padding = jax.random.normal(ks[10], (obs_dim,), dtype=jnp.float32)

        # ---- pack all matrix weights into one zero-padded bf16 slab ---------
        def pad_block(w):
            blk = jnp.zeros((LANE, LANE), jnp.float32)
            return blk.at[:w.shape[0], :w.shape[1]].set(w)

        blocks = [pad_block(We),                       # 0: token embed
                  pad_block(Wq), pad_block(Wk), pad_block(Wv),   # 1-3: fused QKV
                  pad_block(Wo),                       # 4
                  pad_block(W1), pad_block(W2),        # 5, 6
                  pad_block(Wh),                       # 7
                  pad_block(Wc[:, :n_clusters]),       # 8: cbet logits head
                  pad_block(Wc[:, n_clusters:])]       # 9: cbet offsets head
        self.w_all = jnp.concatenate(blocks, axis=1).astype(jnp.bfloat16)

        # ---- pack every 1-D parameter (biases, LN gains/betas) into one array
        def pad_row(v):
            r = jnp.zeros((LANE,), jnp.float32)
            return r.at[:v.shape[0]].set(v)

        rows = [pad_row(jnp.zeros((E,), jnp.float32)),            # 0  be
                pad_row(jnp.ones((E,), jnp.float32)),             # 1  ln1 gamma
                pad_row(jnp.zeros((E,), jnp.float32)),            # 2  ln1 beta
                pad_row(jnp.ones((E,), jnp.float32)),             # 3  ln2 gamma
                pad_row(jnp.zeros((E,), jnp.float32)),            # 4  ln2 beta
                pad_row(jnp.ones((E,), jnp.float32)),             # 5  lnf gamma
                pad_row(jnp.zeros((E,), jnp.float32)),            # 6  lnf beta
                pad_row(jnp.zeros((4 * E,), jnp.float32)),        # 7  b1
                pad_row(jnp.zeros((E,), jnp.float32)),            # 8  b2
                pad_row(jnp.zeros((O,), jnp.float32)),            # 9  bh
                pad_row(jnp.zeros((n_clusters,), jnp.float32)),   # 10 bc (logits)
                pad_row(jnp.zeros((n_clusters * act_dim,), jnp.float32)),  # 11
                ] + [jnp.zeros((LANE,), jnp.float32)] * 4
        self.bias_all = jnp.stack(rows, axis=0)                   # (16,128)

        self.cluster_centers = cluster_centers
        self.centers_p = (jnp.zeros((LANE, LANE), jnp.float32)
                          .at[:n_clusters, :act_dim].set(cluster_centers))

    def __call__(self, obs_seq, goal_seq, action_seq, padding_seq, rng_key,
                 predict_with_offset=True):
        n, t, _ = obs_seq.shape
        has_actions = action_seq is not None
        act = action_seq if has_actions else jnp.zeros((n, t, self.act_dim),
                                                       jnp.float32)
        pad = padding_seq if padding_seq is not None else jnp.zeros((n, t),
                                                                    jnp.bool_)
        # torch.multinomial randomness -> inverse-CDF over per-row uniforms
        u = jax.random.uniform(rng_key, (n * t,), dtype=jnp.float32)

        a_hat, loss, scalars = _bet_forward(
            self.w_all, self.bias_all, self.centers_p, obs_seq, act, pad, u,
            n=n, t=t, obs_dim=self.obs_dim, act_dim=self.act_dim,
            n_embd=self.n_embd, gpt_output_dim=self.gpt_output_dim,
            k=self.K, gamma=self.gamma, offset_mult=self.offset_loss_multiplier,
            predict_with_offset=bool(predict_with_offset))

        if not has_actions:
            return a_hat, None, {}

        vals = jax.device_get(scalars)   # single device->host sync for the dict
        loss_dict = {
            'classification_loss': float(vals[0]),
            'offset_loss': float(vals[1]),
            'loss': float(vals[2]),
            'L2_loss': float(vals[3]),
            'L2_loss_normalized': float(vals[4]),
            'L1_loss': float(vals[5]),
        }
        return a_hat, loss, loss_dict


# -----------------------------------------------------------------------------
if __name__ == "__main__":
    key = jax.random.PRNGKey(0)
    k_obs, k_act, k_samp = jax.random.split(key, 3)

    N, T = 2, 8
    obs_dim, act_dim, n_clusters = 16, 4, 8

    model = BehaviorTransformerPallas(obs_dim=obs_dim, act_dim=act_dim, goal_dim=0,
                                      n_clusters=n_clusters)

    obs_seq = jax.random.normal(k_obs, (N, T, obs_dim), dtype=jnp.float32)
    action_seq = jax.random.normal(k_act, (N, T, act_dim), dtype=jnp.float32)
    padding_seq = jnp.zeros((N, T), dtype=jnp.bool_).at[0, -1].set(True)

    a_hat, loss, loss_dict = model(obs_seq, None, action_seq, padding_seq, k_samp)
    jax.block_until_ready((a_hat, loss))

    assert a_hat.shape == (N, T, act_dim)
    assert loss.shape == ()
    assert set(loss_dict) == {'classification_loss', 'offset_loss', 'loss',
                              'L2_loss', 'L2_loss_normalized', 'L1_loss'}
    print("KERNEL_OK")
</pallas_src>

<mosaic_0001>
module attributes {stable_mosaic.version = 11 : i64} {
  func.func @kernel(%arg0: memref<16x128xf32, #tpu.memory_space<vmem>>, %arg1: memref<128x1280xbf16, #tpu.memory_space<vmem>>, %arg2: memref<16x128xf32, #tpu.memory_space<vmem>>, %arg3: memref<128x128xf32, #tpu.memory_space<vmem>>, %arg4: memref<16x128xf32, #tpu.memory_space<vmem>>, %arg5: memref<16x128xf32, #tpu.memory_space<vmem>>, %arg6: memref<16x128xf32, #tpu.memory_space<vmem>>, %arg7: memref<1x128xf32, #tpu.memory_space<vmem>>) attributes {dimension_semantics = [], scalar_prefetch = 0 : i64, scratch_operands = 0 : i64, tpu.core_type = #tpu.core_type<tc>} {
    %0 = tpu.iota {dimensions = array<i32: 1>} : vector<1x128xi32>
    %c32_i32 = arith.constant 32 : i32
    %1 = vector.broadcast %c32_i32 : i32 to vector<1x128xi32>
    %2 = arith.cmpi slt, %0, %1 : vector<1x128xi32>
    %3 = arith.extui %2 : vector<1x128xi1> to vector<1x128xi32>
    %4 = arith.sitofp %3 : vector<1x128xi32> to vector<1x128xf32>
    %c0 = arith.constant 0 : index
    %c0_0 = arith.constant 0 : index
    %5 = vector.load %arg0[%c0, %c0_0] : memref<16x128xf32, #tpu.memory_space<vmem>>, vector<16x128xf32>
    %c0_1 = arith.constant 0 : index
    %c0_2 = arith.constant 0 : index
    %6 = vector.load %arg3[%c0_1, %c0_2] : memref<128x128xf32, #tpu.memory_space<vmem>>, vector<128x128xf32>
    %c0_3 = arith.constant 0 : index
    %c0_4 = arith.constant 0 : index
    %7 = vector.load %arg4[%c0_3, %c0_4] : memref<16x128xf32, #tpu.memory_space<vmem>>, vector<16x128xf32>
    %c0_5 = arith.constant 0 : index
    %c0_6 = arith.constant 0 : index
    %8 = vector.load %arg5[%c0_5, %c0_6] : memref<16x128xf32, #tpu.memory_space<vmem>>, vector<16x128xf32>
    %c0_7 = arith.constant 0 : index
    %c0_8 = arith.constant 0 : index
    %9 = vector.load %arg1[%c0_7, %c0_8] : memref<128x1280xbf16, #tpu.memory_space<vmem>>, vector<128x128xbf16>
    %10 = arith.truncf %5 : vector<16x128xf32> to vector<16x128xbf16>
    %cst = arith.constant dense<0.000000e+00> : vector<16x128xf32>
    %11 = tpu.matmul %10, %9, %cst {dimension_numbers = #tpu.dot_dimension_numbers<[1], [0], [0], [1], [0, 0, 1, 1], [], []>} : vector<16x128xbf16>, vector<128x128xbf16>, vector<16x128xf32> -> vector<16x128xf32>
    %c0_9 = arith.constant 0 : index
    %c0_10 = arith.constant 0 : index
    %12 = vector.load %arg2[%c0_9, %c0_10] : memref<16x128xf32, #tpu.memory_space<vmem>>, vector<1x128xf32>
    %13 = vector.broadcast %12 : vector<1x128xf32> to vector<16x128xf32>
    %14 = arith.addf %11, %13 : vector<16x128xf32>
    %cst_11 = arith.constant dense<0.000000e+00> : vector<16xf32>
    %15 = vector.multi_reduction <add>, %14, %cst_11 [1] : vector<16x128xf32> to vector<16xf32>
    %16 = vector.shape_cast %15 : vector<16xf32> to vector<16x1xf32>
    %cst_12 = arith.constant 3.125000e-02 : f32
    %17 = vector.broadcast %cst_12 : f32 to vector<16x1xf32>
    %18 = arith.mulf %16, %17 : vector<16x1xf32>
    %19 = vector.broadcast %18 : vector<16x1xf32> to vector<16x128xf32>
    %20 = arith.subf %14, %19 : vector<16x128xf32>
    %21 = arith.mulf %20, %20 : vector<16x128xf32>
    %22 = vector.broadcast %4 : vector<1x128xf32> to vector<16x128xf32>
    %23 = arith.mulf %21, %22 : vector<16x128xf32>
    %cst_13 = arith.constant dense<0.000000e+00> : vector<16xf32>
    %24 = vector.multi_reduction <add>, %23, %cst_13 [1] : vector<16x128xf32> to vector<16xf32>
    %25 = vector.shape_cast %24 : vector<16xf32> to vector<16x1xf32>
    %cst_14 = arith.constant 3.125000e-02 : f32
    %26 = vector.broadcast %cst_14 : f32 to vector<16x1xf32>
    %27 = arith.mulf %25, %26 : vector<16x1xf32>
    %cst_15 = arith.constant 9.99999974E-6 : f32
    %28 = vector.broadcast %cst_15 : f32 to vector<16x1xf32>
    %29 = arith.addf %27, %28 : vector<16x1xf32>
    %30 = math.rsqrt %29 : vector<16x1xf32>
    %31 = vector.broadcast %30 : vector<16x1xf32> to vector<16x128xf32>
    %32 = arith.mulf %20, %31 : vector<16x128xf32>
    %c1 = arith.constant 1 : index
    %c0_16 = arith.constant 0 : index
    %33 = vector.load %arg2[%c1, %c0_16] : memref<16x128xf32, #tpu.memory_space<vmem>>, vector<1x128xf32>
    %34 = vector.broadcast %33 : vector<1x128xf32> to vector<16x128xf32>
    %35 = arith.mulf %32, %34 : vector<16x128xf32>
    %c2 = arith.constant 2 : index
    %c0_17 = arith.constant 0 : index
    %36 = vector.load %arg2[%c2, %c0_17] : memref<16x128xf32, #tpu.memory_space<vmem>>, vector<1x128xf32>
    %37 = vector.broadcast %36 : vector<1x128xf32> to vector<16x128xf32>
    %38 = arith.addf %35, %37 : vector<16x128xf32>
    %c0_18 = arith.constant 0 : index
    %c128 = arith.constant 128 : index
    %39 = vector.load %arg1[%c0_18, %c128] : memref<128x1280xbf16, #tpu.memory_space<vmem>>, vector<128x384xbf16>
    %40 = arith.truncf %38 : vector<16x128xf32> to vector<16x128xbf16>
    %cst_19 = arith.constant dense<0.000000e+00> : vector<16x384xf32>
    %41 = tpu.matmul %40, %39, %cst_19 {dimension_numbers = #tpu.dot_dimension_numbers<[1], [0], [0], [1], [0, 0, 1, 1], [], []>} : vector<16x128xbf16>, vector<128x384xbf16>, vector<16x384xf32> -> vector<16x384xf32>
    %42 = vector.extract_strided_slice %41 {offsets = [0, 0], sizes = [16, 128], strides = [1, 1]} : vector<16x384xf32> to vector<16x128xf32>
    %43 = vector.shape_cast %42 : vector<16x128xf32> to vector<2x8x128xf32>
    %44 = vector.extract_strided_slice %41 {offsets = [0, 128], sizes = [16, 128], strides = [1, 1]} : vector<16x384xf32> to vector<16x128xf32>
    %45 = vector.shape_cast %44 : vector<16x128xf32> to vector<2x8x128xf32>
    %46 = vector.extract_strided_slice %41 {offsets = [0, 256], sizes = [16, 128], strides = [1, 1]} : vector<16x384xf32> to vector<16x128xf32>
    %47 = vector.shape_cast %46 : vector<16x128xf32> to vector<2x8x128xf32>
    %48 = arith.truncf %43 : vector<2x8x128xf32> to vector<2x8x128xbf16>
    %49 = arith.truncf %45 : vector<2x8x128xf32> to vector<2x8x128xbf16>
    "tpu.trace_start"() <{level = 10 : i32, message = "nqe,nke->nqk"}> : () -> ()
    %cst_20 = arith.constant dense<0.000000e+00> : vector<2x8x8xf32>
    %50 = tpu.matmul %48, %49, %cst_20 {dimension_numbers = #tpu.dot_dimension_numbers<[2], [2], [1], [1], [0, 0, 0, 1, 1, 1], [0], [0]>} : vector<2x8x128xbf16>, vector<2x8x128xbf16>, vector<2x8x8xf32> -> vector<2x8x8xf32>
    "tpu.trace_stop"() : () -> ()
    %cst_21 = arith.constant 0.176776692 : f32
    %51 = vector.broadcast %cst_21 : f32 to vector<2x8x8xf32>
    %52 = arith.mulf %50, %51 : vector<2x8x8xf32>
    %53 = tpu.iota {dimensions = array<i32: 1>} : vector<2x8x8xi32>
    %54 = tpu.iota {dimensions = array<i32: 2>} : vector<2x8x8xi32>
    %55 = arith.cmpi sle, %54, %53 : vector<2x8x8xi32>
    %cst_22 = arith.constant -1.000000e+30 : f32
    %56 = vector.broadcast %cst_22 : f32 to vector<2x8x8xf32>
    %57 = arith.select %55, %52, %56 : vector<2x8x8xi1>, vector<2x8x8xf32>
    %cst_23 = arith.constant dense<0xFF800000> : vector<2x8xf32>
    %58 = vector.multi_reduction <maximumf>, %57, %cst_23 [2] : vector<2x8x8xf32> to vector<2x8xf32>
    %59 = vector.shape_cast %58 : vector<2x8xf32> to vector<2x8x1xf32>
    %60 = vector.broadcast %59 : vector<2x8x1xf32> to vector<2x8x8xf32>
    %61 = arith.subf %57, %60 : vector<2x8x8xf32>
    %62 = math.exp %61 : vector<2x8x8xf32>
    %cst_24 = arith.constant dense<0.000000e+00> : vector<2x8xf32>
    %63 = vector.multi_reduction <add>, %62, %cst_24 [2] : vector<2x8x8xf32> to vector<2x8xf32>
    %64 = vector.shape_cast %63 : vector<2x8xf32> to vector<2x8x1xf32>
    %65 = tpu.reciprocal %64 {approx = true} : vector<2x8x1xf32> -> vector<2x8x1xf32>
    %66 = vector.broadcast %65 : vector<2x8x1xf32> to vector<2x8x8xf32>
    %67 = arith.mulf %62, %66 : vector<2x8x8xf32>
    %68 = arith.truncf %67 : vector<2x8x8xf32> to vector<2x8x8xbf16>
    %69 = arith.truncf %47 : vector<2x8x128xf32> to vector<2x8x128xbf16>
    "tpu.trace_start"() <{level = 10 : i32, message = "nqk,nke->nqe"}> : () -> ()
    %cst_25 = arith.constant dense<0.000000e+00> : vector<2x8x128xf32>
    %70 = tpu.matmul %68, %69, %cst_25 {dimension_numbers = #tpu.dot_dimension_numbers<[2], [1], [1], [2], [0, 0, 0, 1, 1, 2], [0], [0]>} : vector<2x8x8xbf16>, vector<2x8x128xbf16>, vector<2x8x128xf32> -> vector<2x8x128xf32>
    "tpu.trace_stop"() : () -> ()
    %71 = vector.shape_cast %70 : vector<2x8x128xf32> to vector<16x128xf32>
    %c0_26 = arith.constant 0 : index
    %c512 = arith.constant 512 : index
    %72 = vector.load %arg1[%c0_26, %c512] : memref<128x1280xbf16, #tpu.memory_space<vmem>>, vector<128x128xbf16>
    %73 = arith.truncf %71 : vector<16x128xf32> to vector<16x128xbf16>
    %cst_27 = arith.constant dense<0.000000e+00> : vector<16x128xf32>
    %74 = tpu.matmul %73, %72, %cst_27 {dimension_numbers = #tpu.dot_dimension_numbers<[1], [0], [0], [1], [0, 0, 1, 1], [], []>} : vector<16x128xbf16>, vector<128x128xbf16>, vector<16x128xf32> -> vector<16x128xf32>
    %75 = arith.addf %14, %74 : vector<16x128xf32>
    %cst_28 = arith.constant dense<0.000000e+00> : vector<16xf32>
    %76 = vector.multi_reduction <add>, %75, %cst_28 [1] : vector<16x128xf32> to vector<16xf32>
    %77 = vector.shape_cast %76 : vector<16xf32> to vector<16x1xf32>
    %cst_29 = arith.constant 3.125000e-02 : f32
    %78 = vector.broadcast %cst_29 : f32 to vector<16x1xf32>
    %79 = arith.mulf %77, %78 : vector<16x1xf32>
    %80 = vector.broadcast %79 : vector<16x1xf32> to vector<16x128xf32>
    %81 = arith.subf %75, %80 : vector<16x128xf32>
    %82 = arith.mulf %81, %81 : vector<16x128xf32>
    %83 = vector.broadcast %4 : vector<1x128xf32> to vector<16x128xf32>
    %84 = arith.mulf %82, %83 : vector<16x128xf32>
    %cst_30 = arith.constant dense<0.000000e+00> : vector<16xf32>
    %85 = vector.multi_reduction <add>, %84, %cst_30 [1] : vector<16x128xf32> to vector<16xf32>
    %86 = vector.shape_cast %85 : vector<16xf32> to vector<16x1xf32>
    %cst_31 = arith.constant 3.125000e-02 : f32
    %87 = vector.broadcast %cst_31 : f32 to vector<16x1xf32>
    %88 = arith.mulf %86, %87 : vector<16x1xf32>
    %cst_32 = arith.constant 9.99999974E-6 : f32
    %89 = vector.broadcast %cst_32 : f32 to vector<16x1xf32>
    %90 = arith.addf %88, %89 : vector<16x1xf32>
    %91 = math.rsqrt %90 : vector<16x1xf32>
    %92 = vector.broadcast %91 : vector<16x1xf32> to vector<16x128xf32>
    %93 = arith.mulf %81, %92 : vector<16x128xf32>
    %c3 = arith.constant 3 : index
    %c0_33 = arith.constant 0 : index
    %94 = vector.load %arg2[%c3, %c0_33] : memref<16x128xf32, #tpu.memory_space<vmem>>, vector<1x128xf32>
    %95 = vector.broadcast %94 : vector<1x128xf32> to vector<16x128xf32>
    %96 = arith.mulf %93, %95 : vector<16x128xf32>
    %c4 = arith.constant 4 : index
    %c0_34 = arith.constant 0 : index
    %97 = vector.load %arg2[%c4, %c0_34] : memref<16x128xf32, #tpu.memory_space<vmem>>, vector<1x128xf32>
    %98 = vector.broadcast %97 : vector<1x128xf32> to vector<16x128xf32>
    %99 = arith.addf %96, %98 : vector<16x128xf32>
    %c0_35 = arith.constant 0 : index
    %c640 = arith.constant 640 : index
    %100 = vector.load %arg1[%c0_35, %c640] : memref<128x1280xbf16, #tpu.memory_space<vmem>>, vector<128x128xbf16>
    %101 = arith.truncf %99 : vector<16x128xf32> to vector<16x128xbf16>
    %cst_36 = arith.constant dense<0.000000e+00> : vector<16x128xf32>
    %102 = tpu.matmul %101, %100, %cst_36 {dimension_numbers = #tpu.dot_dimension_numbers<[1], [0], [0], [1], [0, 0, 1, 1], [], []>} : vector<16x128xbf16>, vector<128x128xbf16>, vector<16x128xf32> -> vector<16x128xf32>
    %c7 = arith.constant 7 : index
    %c0_37 = arith.constant 0 : index
    %103 = vector.load %arg2[%c7, %c0_37] : memref<16x128xf32, #tpu.memory_space<vmem>>, vector<1x128xf32>
    %104 = vector.broadcast %103 : vector<1x128xf32> to vector<16x128xf32>
    %105 = arith.addf %102, %104 : vector<16x128xf32>
    %106 = arith.mulf %105, %105 : vector<16x128xf32>
    %107 = arith.mulf %105, %106 : vector<16x128xf32>
    %cst_38 = arith.constant 4.471500e-02 : f32
    %108 = vector.broadcast %cst_38 : f32 to vector<16x128xf32>
    %109 = arith.mulf %108, %107 : vector<16x128xf32>
    %110 = arith.addf %105, %109 : vector<16x128xf32>
    %cst_39 = arith.constant 0.797884583 : f32
    %111 = vector.broadcast %cst_39 : f32 to vector<16x128xf32>
    %112 = arith.mulf %111, %110 : vector<16x128xf32>
    %113 = math.tanh %112 : vector<16x128xf32>
    %cst_40 = arith.constant 1.000000e+00 : f32
    %114 = vector.broadcast %cst_40 : f32 to vector<16x128xf32>
    %115 = arith.addf %114, %113 : vector<16x128xf32>
    %cst_41 = arith.constant 5.000000e-01 : f32
    %116 = vector.broadcast %cst_41 : f32 to vector<16x128xf32>
    %117 = arith.mulf %116, %115 : vector<16x128xf32>
    %118 = arith.mulf %105, %117 : vector<16x128xf32>
    %c0_42 = arith.constant 0 : index
    %c768 = arith.constant 768 : index
    %119 = vector.load %arg1[%c0_42, %c768] : memref<128x1280xbf16, #tpu.memory_space<vmem>>, vector<128x128xbf16>
    %120 = arith.truncf %118 : vector<16x128xf32> to vector<16x128xbf16>
    %cst_43 = arith.constant dense<0.000000e+00> : vector<16x128xf32>
    %121 = tpu.matmul %120, %119, %cst_43 {dimension_numbers = #tpu.dot_dimension_numbers<[1], [0], [0], [1], [0, 0, 1, 1], [], []>} : vector<16x128xbf16>, vector<128x128xbf16>, vector<16x128xf32> -> vector<16x128xf32>
    %122 = arith.addf %75, %121 : vector<16x128xf32>
    %c8 = arith.constant 8 : index
    %c0_44 = arith.constant 0 : index
    %123 = vector.load %arg2[%c8, %c0_44] : memref<16x128xf32, #tpu.memory_space<vmem>>, vector<1x128xf32>
    %124 = vector.broadcast %123 : vector<1x128xf32> to vector<16x128xf32>
    %125 = arith.addf %122, %124 : vector<16x128xf32>
    %cst_45 = arith.constant dense<0.000000e+00> : vector<16xf32>
    %126 = vector.multi_reduction <add>, %125, %cst_45 [1] : vector<16x128xf32> to vector<16xf32>
    %127 = vector.shape_cast %126 : vector<16xf32> to vector<16x1xf32>
    %cst_46 = arith.constant 3.125000e-02 : f32
    %128 = vector.broadcast %cst_46 : f32 to vector<16x1xf32>
    %129 = arith.mulf %127, %128 : vector<16x1xf32>
    %130 = vector.broadcast %129 : vector<16x1xf32> to vector<16x128xf32>
    %131 = arith.subf %125, %130 : vector<16x128xf32>
    %132 = arith.mulf %131, %131 : vector<16x128xf32>
    %133 = vector.broadcast %4 : vector<1x128xf32> to vector<16x128xf32>
    %134 = arith.mulf %132, %133 : vector<16x128xf32>
    %cst_47 = arith.constant dense<0.000000e+00> : vector<16xf32>
    %135 = vector.multi_reduction <add>, %134, %cst_47 [1] : vector<16x128xf32> to vector<16xf32>
    %136 = vector.shape_cast %135 : vector<16xf32> to vector<16x1xf32>
    %cst_48 = arith.constant 3.125000e-02 : f32
    %137 = vector.broadcast %cst_48 : f32 to vector<16x1xf32>
    %138 = arith.mulf %136, %137 : vector<16x1xf32>
    %cst_49 = arith.constant 9.99999974E-6 : f32
    %139 = vector.broadcast %cst_49 : f32 to vector<16x1xf32>
    %140 = arith.addf %138, %139 : vector<16x1xf32>
    %141 = math.rsqrt %140 : vector<16x1xf32>
    %142 = vector.broadcast %141 : vector<16x1xf32> to vector<16x128xf32>
    %143 = arith.mulf %131, %142 : vector<16x128xf32>
    %c5 = arith.constant 5 : index
    %c0_50 = arith.constant 0 : index
    %144 = vector.load %arg2[%c5, %c0_50] : memref<16x128xf32, #tpu.memory_space<vmem>>, vector<1x128xf32>
    %145 = vector.broadcast %144 : vector<1x128xf32> to vector<16x128xf32>
    %146 = arith.mulf %143, %145 : vector<16x128xf32>
    %c6 = arith.constant 6 : index
    %c0_51 = arith.constant 0 : index
    %147 = vector.load %arg2[%c6, %c0_51] : memref<16x128xf32, #tpu.memory_space<vmem>>, vector<1x128xf32>
    %148 = vector.broadcast %147 : vector<1x128xf32> to vector<16x128xf32>
    %149 = arith.addf %146, %148 : vector<16x128xf32>
    %c0_52 = arith.constant 0 : index
    %c896 = arith.constant 896 : index
    %150 = vector.load %arg1[%c0_52, %c896] : memref<128x1280xbf16, #tpu.memory_space<vmem>>, vector<128x128xbf16>
    %151 = arith.truncf %149 : vector<16x128xf32> to vector<16x128xbf16>
    %cst_53 = arith.constant dense<0.000000e+00> : vector<16x128xf32>
    %152 = tpu.matmul %151, %150, %cst_53 {dimension_numbers = #tpu.dot_dimension_numbers<[1], [0], [0], [1], [0, 0, 1, 1], [], []>} : vector<16x128xbf16>, vector<128x128xbf16>, vector<16x128xf32> -> vector<16x128xf32>
    %c9 = arith.constant 9 : index
    %c0_54 = arith.constant 0 : index
    %153 = vector.load %arg2[%c9, %c0_54] : memref<16x128xf32, #tpu.memory_space<vmem>>, vector<1x128xf32>
    %154 = vector.broadcast %153 : vector<1x128xf32> to vector<16x128xf32>
    %155 = arith.addf %152, %154 : vector<16x128xf32>
    %c0_55 = arith.constant 0 : index
    %c1024 = arith.constant 1024 : index
    %156 = vector.load %arg1[%c0_55, %c1024] : memref<128x1280xbf16, #tpu.memory_space<vmem>>, vector<128x128xbf16>
    %157 = arith.truncf %155 : vector<16x128xf32> to vector<16x128xbf16>
    %cst_56 = arith.constant dense<0.000000e+00> : vector<16x128xf32>
    %158 = tpu.matmul %157, %156, %cst_56 {dimension_numbers = #tpu.dot_dimension_numbers<[1], [0], [0], [1], [0, 0, 1, 1], [], []>} : vector<16x128xbf16>, vector<128x128xbf16>, vector<16x128xf32> -> vector<16x128xf32>
    %c10 = arith.constant 10 : index
    %c0_57 = arith.constant 0 : index
    %159 = vector.load %arg2[%c10, %c0_57] : memref<16x128xf32, #tpu.memory_space<vmem>>, vector<1x128xf32>
    %160 = vector.broadcast %159 : vector<1x128xf32> to vector<16x128xf32>
    %161 = arith.addf %158, %160 : vector<16x128xf32>
    %c0_58 = arith.constant 0 : index
    %c1152 = arith.constant 1152 : index
    %162 = vector.load %arg1[%c0_58, %c1152] : memref<128x1280xbf16, #tpu.memory_space<vmem>>, vector<128x128xbf16>
    %163 = arith.truncf %155 : vector<16x128xf32> to vector<16x128xbf16>
    %cst_59 = arith.constant dense<0.000000e+00> : vector<16x128xf32>
    %164 = tpu.matmul %163, %162, %cst_59 {dimension_numbers = #tpu.dot_dimension_numbers<[1], [0], [0], [1], [0, 0, 1, 1], [], []>} : vector<16x128xbf16>, vector<128x128xbf16>, vector<16x128xf32> -> vector<16x128xf32>
    %c11 = arith.constant 11 : index
    %c0_60 = arith.constant 0 : index
    %165 = vector.load %arg2[%c11, %c0_60] : memref<16x128xf32, #tpu.memory_space<vmem>>, vector<1x128xf32>
    %166 = vector.broadcast %165 : vector<1x128xf32> to vector<16x128xf32>
    %167 = arith.addf %164, %166 : vector<16x128xf32>
    %168 = tpu.iota {dimensions = array<i32: 1>} : vector<16x128xi32>
    %c8_i32 = arith.constant 8 : i32
    %169 = vector.broadcast %c8_i32 : i32 to vector<16x128xi32>
    %170 = arith.cmpi slt, %168, %169 : vector<16x128xi32>
    %cst_61 = arith.constant -1.000000e+30 : f32
    %171 = vector.broadcast %cst_61 : f32 to vector<16x128xf32>
    %172 = arith.select %170, %161, %171 : vector<16x128xi1>, vector<16x128xf32>
    %cst_62 = arith.constant dense<0xFF800000> : vector<16xf32>
    %173 = vector.multi_reduction <maximumf>, %172, %cst_62 [1] : vector<16x128xf32> to vector<16xf32>
    %174 = vector.shape_cast %173 : vector<16xf32> to vector<16x1xf32>
    %175 = vector.broadcast %174 : vector<16x1xf32> to vector<16x128xf32>
    %176 = arith.subf %172, %175 : vector<16x128xf32>
    %177 = math.exp %176 : vector<16x128xf32>
    %cst_63 = arith.constant dense<0.000000e+00> : vector<16xf32>
    %178 = vector.multi_reduction <add>, %177, %cst_63 [1] : vector<16x128xf32> to vector<16xf32>
    %179 = vector.shape_cast %178 : vector<16xf32> to vector<16x1xf32>
    %180 = tpu.reciprocal %179 {approx = true} : vector<16x1xf32> -> vector<16x1xf32>
    %181 = vector.broadcast %180 : vector<16x1xf32> to vector<16x128xf32>
    %182 = arith.mulf %177, %181 : vector<16x128xf32>
    %183 = tpu.iota {dimensions = array<i32: 0>} : vector<128x128xi32>
    %184 = tpu.iota {dimensions = array<i32: 1>} : vector<128x128xi32>
    %185 = arith.cmpi sle, %183, %184 : vector<128x128xi32>
    %186 = arith.extui %185 : vector<128x128xi1> to vector<128x128xi32>
    %187 = arith.sitofp %186 : vector<128x128xi32> to vector<128x128xf32>
    %cst_64 = arith.constant dense<0.000000e+00> : vector<16x128xf32>
    %188 = tpu.matmul %182, %187, %cst_64 {dimension_numbers = #tpu.dot_dimension_numbers<[1], [0], [0], [1], [0, 0, 1, 1], [], []>} : vector<16x128xf32>, vector<128x128xf32>, vector<16x128xf32> -> vector<16x128xf32>
    %189 = vector.extract_strided_slice %8 {offsets = [0, 0], sizes = [16, 1], strides = [1, 1]} : vector<16x128xf32> to vector<16x1xf32>
    %190 = vector.broadcast %189 : vector<16x1xf32> to vector<16x128xf32>
    %191 = arith.cmpf olt, %188, %190 : vector<16x128xf32>
    %192 = arith.extui %191 : vector<16x128xi1> to vector<16x128xi32>
    %cst_65 = arith.constant dense<0> : vector<16xi32>
    %193 = vector.multi_reduction <add>, %192, %cst_65 [1] : vector<16x128xi32> to vector<16xi32>
    %194 = vector.shape_cast %193 : vector<16xi32> to vector<16x1xi32>
    %c7_i32 = arith.constant 7 : i32
    %195 = vector.broadcast %c7_i32 : i32 to vector<16x1xi32>
    %196 = arith.minsi %194, %195 : vector<16x1xi32>
    %197 = arith.sitofp %183 : vector<128x128xi32> to vector<128x128xf32>
    %198 = arith.sitofp %184 : vector<128x128xi32> to vector<128x128xf32>
    %cst_66 = arith.constant 4.000000e+00 : f32
    %199 = vector.broadcast %cst_66 : f32 to vector<128x128xf32>
    %200 = arith.divf %197, %199 : vector<128x128xf32>
    %201 = math.floor %200 : vector<128x128xf32>
    %cst_67 = arith.constant 4.000000e+00 : f32
    %202 = vector.broadcast %cst_67 : f32 to vector<128x128xf32>
    %203 = arith.mulf %202, %201 : vector<128x128xf32>
    %204 = arith.subf %197, %203 : vector<128x128xf32>
    %205 = arith.cmpf oeq, %204, %198 : vector<128x128xf32>
    %206 = arith.extui %205 : vector<128x128xi1> to vector<128x128xi32>
    %207 = arith.sitofp %206 : vector<128x128xi32> to vector<128x128xf32>
    %208 = vector.broadcast %196 : vector<16x1xi32> to vector<16x128xi32>
    %209 = arith.cmpi eq, %168, %208 : vector<16x128xi32>
    %210 = arith.extui %209 : vector<16x128xi1> to vector<16x128xi32>
    %211 = arith.sitofp %210 : vector<16x128xi32> to vector<16x128xf32>
    %c4_i32 = arith.constant 4 : i32
    %212 = vector.broadcast %c4_i32 : i32 to vector<16x1xi32>
    %213 = arith.muli %196, %212 : vector<16x1xi32>
    %214 = vector.broadcast %213 : vector<16x1xi32> to vector<16x128xi32>
    %215 = arith.cmpi sge, %168, %214 : vector<16x128xi32>
    %c4_i32_68 = arith.constant 4 : i32
    %216 = vector.broadcast %c4_i32_68 : i32 to vector<16x1xi32>
    %217 = arith.addi %213, %216 : vector<16x1xi32>
    %218 = vector.broadcast %217 : vector<16x1xi32> to vector<16x128xi32>
    %219 = arith.cmpi slt, %168, %218 : vector<16x128xi32>
    %220 = arith.andi %215, %219 : vector<16x128xi1>
    %221 = arith.extui %220 : vector<16x128xi1> to vector<16x128xi32>
    %222 = arith.sitofp %221 : vector<16x128xi32> to vector<16x128xf32>
    %cst_69 = arith.constant dense<0.000000e+00> : vector<16x128xf32>
    %223 = tpu.matmul %211, %6, %cst_69 {dimension_numbers = #tpu.dot_dimension_numbers<[1], [0], [0], [1], [0, 0, 1, 1], [], []>} : vector<16x128xf32>, vector<128x128xf32>, vector<16x128xf32> -> vector<16x128xf32>
    %224 = arith.mulf %167, %222 : vector<16x128xf32>
    %cst_70 = arith.constant dense<0.000000e+00> : vector<16x128xf32>
    %225 = tpu.matmul %224, %207, %cst_70 {dimension_numbers = #tpu.dot_dimension_numbers<[1], [0], [0], [1], [0, 0, 1, 1], [], []>} : vector<16x128xf32>, vector<128x128xf32>, vector<16x128xf32> -> vector<16x128xf32>
    %226 = arith.addf %223, %225 : vector<16x128xf32>
    %c0_71 = arith.constant 0 : index
    %c0_72 = arith.constant 0 : index
    %227 = vector.load %arg6[%c0_71, %c0_72] : memref<16x128xf32, #tpu.memory_space<vmem>>, vector<16x128xf32>
    tpu.vector_store %arg6[%c0_71, %c0_72], %226 {strides = array<i32>} : memref<16x128xf32, #tpu.memory_space<vmem>>, vector<16x128xf32>,
    "tpu.trace_start"() <{level = 10 : i32, message = "ma,ka->mk"}> : () -> ()
    %cst_73 = arith.constant dense<0.000000e+00> : vector<16x128xf32>
    %228 = tpu.matmul %7, %6, %cst_73 {dimension_numbers = #tpu.dot_dimension_numbers<[1], [1], [0], [0], [0, 0, 1, 0], [], []>} : vector<16x128xf32>, vector<128x128xf32>, vector<16x128xf32> -> vector<16x128xf32>
    %cst_74 = arith.constant 1.000000e+00 : f32
    "tpu.trace_stop"() : () -> ()
    %229 = vector.broadcast %cst_74 : f32 to vector<1x128xf32>
    %230 = arith.mulf %6, %6 : vector<128x128xf32>
    "tpu.trace_start"() <{level = 10 : i32, message = "ra,ka->rk"}> : () -> ()
    %cst_75 = arith.constant dense<0.000000e+00> : vector<1x128xf32>
    %231 = tpu.matmul %229, %230, %cst_75 {dimension_numbers = #tpu.dot_dimension_numbers<[1], [1], [0], [0], [0, 0, 1, 0], [], []>} : vector<1x128xf32>, vector<128x128xf32>, vector<1x128xf32> -> vector<1x128xf32>
    %c8_i32_76 = arith.constant 8 : i32
    "tpu.trace_stop"() : () -> ()
    %232 = vector.broadcast %c8_i32_76 : i32 to vector<1x128xi32>
    %233 = arith.cmpi slt, %0, %232 : vector<1x128xi32>
    %cst_77 = arith.constant 2.000000e+00 : f32
    %234 = vector.broadcast %cst_77 : f32 to vector<16x128xf32>
    %235 = arith.mulf %234, %228 : vector<16x128xf32>
    %236 = vector.broadcast %231 : vector<1x128xf32> to vector<16x128xf32>
    %237 = arith.subf %236, %235 : vector<16x128xf32>
    %cst_78 = arith.constant 1.000000e+30 : f32
    %238 = vector.shape_cast %233 : vector<1x128xi1> to vector<1x128xi1>
    %239 = vector.broadcast %238 : vector<1x128xi1> to vector<16x128xi1>
    %240 = vector.broadcast %cst_78 : f32 to vector<16x128xf32>
    %241 = arith.select %239, %237, %240 : vector<16x128xi1>, vector<16x128xf32>
    %cst_79 = arith.constant dense<0x7F800000> : vector<16xf32>
    %242 = vector.multi_reduction <minimumf>, %241, %cst_79 [1] : vector<16x128xf32> to vector<16xf32>
    %243 = vector.shape_cast %242 : vector<16xf32> to vector<16x1xf32>
    %244 = vector.broadcast %243 : vector<16x1xf32> to vector<16x128xf32>
    %245 = arith.cmpf ole, %241, %244 : vector<16x128xf32>
    %c128_i32 = arith.constant 128 : i32
    %246 = vector.broadcast %c128_i32 : i32 to vector<16x128xi32>
    %247 = arith.select %245, %168, %246 : vector<16x128xi1>, vector<16x128xi32>
    %cst_80 = arith.constant dense<2147483647> : vector<16xi32>
    %248 = vector.multi_reduction <minsi>, %247, %cst_80 [1] : vector<16x128xi32> to vector<16xi32>
    %249 = vector.shape_cast %248 : vector<16xi32> to vector<16x1xi32>
    %250 = vector.broadcast %249 : vector<16x1xi32> to vector<16x128xi32>
    %251 = arith.cmpi eq, %168, %250 : vector<16x128xi32>
    %252 = arith.extui %251 : vector<16x128xi1> to vector<16x128xi32>
    %253 = arith.sitofp %252 : vector<16x128xi32> to vector<16x128xf32>
    %c4_i32_81 = arith.constant 4 : i32
    %254 = vector.broadcast %c4_i32_81 : i32 to vector<16x1xi32>
    %255 = arith.muli %249, %254 : vector<16x1xi32>
    %256 = vector.broadcast %255 : vector<16x1xi32> to vector<16x128xi32>
    %257 = arith.cmpi sge, %168, %256 : vector<16x128xi32>
    %c4_i32_82 = arith.constant 4 : i32
    %258 = vector.broadcast %c4_i32_82 : i32 to vector<16x1xi32>
    %259 = arith.addi %255, %258 : vector<16x1xi32>
    %260 = vector.broadcast %259 : vector<16x1xi32> to vector<16x128xi32>
    %261 = arith.cmpi slt, %168, %260 : vector<16x128xi32>
    %262 = arith.andi %257, %261 : vector<16x128xi1>
    %263 = arith.extui %262 : vector<16x128xi1> to vector<16x128xi32>
    %264 = arith.sitofp %263 : vector<16x128xi32> to vector<16x128xf32>
    %cst_83 = arith.constant dense<0.000000e+00> : vector<16x128xf32>
    %265 = tpu.matmul %253, %6, %cst_83 {dimension_numbers = #tpu.dot_dimension_numbers<[1], [0], [0], [1], [0, 0, 1, 1], [], []>} : vector<16x128xf32>, vector<128x128xf32>, vector<16x128xf32> -> vector<16x128xf32>
    %266 = arith.subf %7, %265 : vector<16x128xf32>
    %267 = arith.mulf %167, %264 : vector<16x128xf32>
    %cst_84 = arith.constant dense<0.000000e+00> : vector<16x128xf32>
    %268 = tpu.matmul %267, %207, %cst_84 {dimension_numbers = #tpu.dot_dimension_numbers<[1], [0], [0], [1], [0, 0, 1, 1], [], []>} : vector<16x128xf32>, vector<128x128xf32>, vector<16x128xf32> -> vector<16x128xf32>
    %269 = arith.subf %268, %266 : vector<16x128xf32>
    %270 = arith.mulf %269, %269 : vector<16x128xf32>
    %271 = math.log %179 : vector<16x1xf32>
    %272 = vector.broadcast %271 : vector<16x1xf32> to vector<16x128xf32>
    %273 = arith.subf %176, %272 : vector<16x128xf32>
    %274 = arith.mulf %253, %273 : vector<16x128xf32>
    %cst_85 = arith.constant dense<0.000000e+00> : vector<16xf32>
    %275 = vector.multi_reduction <add>, %274, %cst_85 [1] : vector<16x128xf32> to vector<16xf32>
    %276 = vector.shape_cast %275 : vector<16xf32> to vector<16x1xf32>
    %277 = math.exp %276 : vector<16x1xf32>
    %cst_86 = arith.constant 1.000000e+00 : f32
    %278 = vector.broadcast %cst_86 : f32 to vector<16x1xf32>
    %279 = arith.minimumf %277, %278 : vector<16x1xf32>
    %cst_87 = arith.constant 1.000000e+00 : f32
    %280 = vector.broadcast %cst_87 : f32 to vector<16x1xf32>
    %281 = arith.subf %280, %279 : vector<16x1xf32>
    %cst_88 = arith.constant 1.000000e+00 : f32
    %282 = vector.broadcast %cst_88 : f32 to vector<16x1xf32>
    %283 = arith.subf %282, %279 : vector<16x1xf32>
    %284 = arith.mulf %281, %283 : vector<16x1xf32>
    %cst_89 = arith.constant 0.000000e+00 : f32
    %285 = vector.broadcast %cst_89 : f32 to vector<16x1xf32>
    %286 = arith.subf %285, %284 : vector<16x1xf32>
    %287 = arith.mulf %286, %276 : vector<16x1xf32>
    %288 = vector.extract_strided_slice %8 {offsets = [0, 1], sizes = [16, 1], strides = [1, 1]} : vector<16x128xf32> to vector<16x1xf32>
    %cst_90 = arith.constant 1.000000e+00 : f32
    %289 = vector.broadcast %cst_90 : f32 to vector<16x1xf32>
    %290 = arith.subf %289, %288 : vector<16x1xf32>
    %291 = arith.mulf %287, %290 : vector<16x1xf32>
    %292 = vector.broadcast %290 : vector<16x1xf32> to vector<16x128xf32>
    %293 = arith.mulf %270, %292 : vector<16x128xf32>
    %294 = arith.subf %226, %7 : vector<16x128xf32>
    %295 = arith.mulf %294, %294 : vector<16x128xf32>
    %296 = math.absf %294 : vector<16x128xf32>
    %297 = arith.mulf %7, %7 : vector<16x128xf32>
    %cst_91 = arith.constant dense<0.000000e+00> : vector<16xf32>
    %298 = vector.multi_reduction <add>, %297, %cst_91 [1] : vector<16x128xf32> to vector<16xf32>
    %299 = vector.shape_cast %298 : vector<16xf32> to vector<16x1xf32>
    %300 = math.sqrt %299 : vector<16x1xf32>
    %cst_92 = arith.constant 9.99999971E-10 : f32
    %301 = vector.broadcast %cst_92 : f32 to vector<16x1xf32>
    %302 = arith.addf %300, %301 : vector<16x1xf32>
    %303 = vector.broadcast %302 : vector<16x1xf32> to vector<16x128xf32>
    %304 = arith.divf %295, %303 : vector<16x128xf32>
    %c0_i32 = arith.constant 0 : i32
    %305 = vector.broadcast %c0_i32 : i32 to vector<1x128xi32>
    %306 = arith.cmpi eq, %0, %305 : vector<1x128xi32>
    %cst_93 = arith.constant dense<0.000000e+00> : vector<16xf32>
    %307 = vector.multi_reduction <add>, %291, %cst_93 [1] : vector<16x1xf32> to vector<16xf32>
    %308 = vector.shape_cast %307 : vector<16xf32> to vector<16x1xf32>
    %cst_94 = arith.constant dense<0.000000e+00> : vector<1xf32>
    %309 = vector.multi_reduction <add>, %308, %cst_94 [0] : vector<16x1xf32> to vector<1xf32>
    %310 = vector.shape_cast %309 : vector<1xf32> to vector<1x1xf32>
    %cst_95 = arith.constant 0.000000e+00 : f32
    %311 = vector.shape_cast %310 : vector<1x1xf32> to vector<1x1xf32>
    %312 = vector.broadcast %311 : vector<1x1xf32> to vector<1x128xf32>
    %313 = vector.broadcast %cst_95 : f32 to vector<1x128xf32>
    %314 = arith.select %306, %312, %313 : vector<1x128xi1>, vector<1x128xf32>
    %c1_i32 = arith.constant 1 : i32
    %315 = vector.broadcast %c1_i32 : i32 to vector<1x128xi32>
    %316 = arith.cmpi eq, %0, %315 : vector<1x128xi32>
    %cst_96 = arith.constant dense<0.000000e+00> : vector<16xf32>
    %317 = vector.multi_reduction <add>, %293, %cst_96 [1] : vector<16x128xf32> to vector<16xf32>
    %318 = vector.shape_cast %317 : vector<16xf32> to vector<16x1xf32>
    %cst_97 = arith.constant dense<0.000000e+00> : vector<1xf32>
    %319 = vector.multi_reduction <add>, %318, %cst_97 [0] : vector<16x1xf32> to vector<1xf32>
    %320 = vector.shape_cast %319 : vector<1xf32> to vector<1x1xf32>
    %cst_98 = arith.constant 0.000000e+00 : f32
    %321 = vector.shape_cast %320 : vector<1x1xf32> to vector<1x1xf32>
    %322 = vector.broadcast %321 : vector<1x1xf32> to vector<1x128xf32>
    %323 = vector.broadcast %cst_98 : f32 to vector<1x128xf32>
    %324 = arith.select %316, %322, %323 : vector<1x128xi1>, vector<1x128xf32>
    %325 = arith.addf %314, %324 : vector<1x128xf32>
    %c2_i32 = arith.constant 2 : i32
    %326 = vector.broadcast %c2_i32 : i32 to vector<1x128xi32>
    %327 = arith.cmpi eq, %0, %326 : vector<1x128xi32>
    %cst_99 = arith.constant dense<0.000000e+00> : vector<16xf32>
    %328 = vector.multi_reduction <add>, %295, %cst_99 [1] : vector<16x128xf32> to vector<16xf32>
    %329 = vector.shape_cast %328 : vector<16xf32> to vector<16x1xf32>
    %cst_100 = arith.constant dense<0.000000e+00> : vector<1xf32>
    %330 = vector.multi_reduction <add>, %329, %cst_100 [0] : vector<16x1xf32> to vector<1xf32>
    %331 = vector.shape_cast %330 : vector<1xf32> to vector<1x1xf32>
    %cst_101 = arith.constant 0.000000e+00 : f32
    %332 = vector.shape_cast %331 : vector<1x1xf32> to vector<1x1xf32>
    %333 = vector.broadcast %332 : vector<1x1xf32> to vector<1x128xf32>
    %334 = vector.broadcast %cst_101 : f32 to vector<1x128xf32>
    %335 = arith.select %327, %333, %334 : vector<1x128xi1>, vector<1x128xf32>
    %336 = arith.addf %325, %335 : vector<1x128xf32>
    %c3_i32 = arith.constant 3 : i32
    %337 = vector.broadcast %c3_i32 : i32 to vector<1x128xi32>
    %338 = arith.cmpi eq, %0, %337 : vector<1x128xi32>
    %cst_102 = arith.constant dense<0.000000e+00> : vector<16xf32>
    %339 = vector.multi_reduction <add>, %296, %cst_102 [1] : vector<16x128xf32> to vector<16xf32>
    %340 = vector.shape_cast %339 : vector<16xf32> to vector<16x1xf32>
    %cst_103 = arith.constant dense<0.000000e+00> : vector<1xf32>
    %341 = vector.multi_reduction <add>, %340, %cst_103 [0] : vector<16x1xf32> to vector<1xf32>
    %342 = vector.shape_cast %341 : vector<1xf32> to vector<1x1xf32>
    %cst_104 = arith.constant 0.000000e+00 : f32
    %343 = vector.shape_cast %342 : vector<1x1xf32> to vector<1x1xf32>
    %344 = vector.broadcast %343 : vector<1x1xf32> to vector<1x128xf32>
    %345 = vector.broadcast %cst_104 : f32 to vector<1x128xf32>
    %346 = arith.select %338, %344, %345 : vector<1x128xi1>, vector<1x128xf32>
    %347 = arith.addf %336, %346 : vector<1x128xf32>
    %c4_i32_105 = arith.constant 4 : i32
    %348 = vector.broadcast %c4_i32_105 : i32 to vector<1x128xi32>
    %349 = arith.cmpi eq, %0, %348 : vector<1x128xi32>
    %cst_106 = arith.constant dense<0.000000e+00> : vector<16xf32>
    %350 = vector.multi_reduction <add>, %304, %cst_106 [1] : vector<16x128xf32> to vector<16xf32>
    %351 = vector.shape_cast %350 : vector<16xf32> to vector<16x1xf32>
    %cst_107 = arith.constant dense<0.000000e+00> : vector<1xf32>
    %352 = vector.multi_reduction <add>, %351, %cst_107 [0] : vector<16x1xf32> to vector<1xf32>
    %353 = vector.shape_cast %352 : vector<1xf32> to vector<1x1xf32>
    %cst_108 = arith.constant 0.000000e+00 : f32
    %354 = vector.shape_cast %353 : vector<1x1xf32> to vector<1x1xf32>
    %355 = vector.broadcast %354 : vector<1x1xf32> to vector<1x128xf32>
    %356 = vector.broadcast %cst_108 : f32 to vector<1x128xf32>
    %357 = arith.select %349, %355, %356 : vector<1x128xi1>, vector<1x128xf32>
    %358 = arith.addf %347, %357 : vector<1x128xf32>
    %c0_109 = arith.constant 0 : index
    %c0_110 = arith.constant 0 : index
    %359 = vector.load %arg7[%c0_109, %c0_110] : memref<1x128xf32, #tpu.memory_space<vmem>>, vector<1x128xf32>
    tpu.vector_store %arg7[%c0_109, %c0_110], %358 {strides = array<i32>} : memref<1x128xf32, #tpu.memory_space<vmem>>, vector<1x128xf32>,
    return
  }
}

</mosaic_0001>

<llo_original>
// kernel: _bet_forward.1
$region0: #{_bet_forward.1}
  #allocation0 [shape = 'u32[]', space=smem, size = 0x4, offset = 0x4, fixed_abs, tag = 'smem constant byte address 0x4 - core index']
  #allocation1 [shape = 'u32[72,128]{1,0:T(1,128)}', space=vmem, size = 0x9000, scoped, tag = 'internal scratch']
  %s0 = inlined_call_operand.vmem [shape: f32[16,128], index: 0, kind: input, shape index: {}]
  %s1 = inlined_call_operand.hbm [shape: bf16[128,1280], index: 1, kind: input, shape index: {}]
  %s2 = inlined_call_operand.vmem [shape: f32[16,128], index: 2, kind: input, shape index: {}]
  %s3 = inlined_call_operand.hbm [shape: f32[128,128], index: 3, kind: input, shape index: {}]
  %s4 = inlined_call_operand.vmem [shape: f32[16,128], index: 4, kind: input, shape index: {}]
  %s5 = inlined_call_operand.vmem [shape: f32[16,128], index: 5, kind: input, shape index: {}]
  %s6 = inlined_call_operand.vmem [shape: f32[16,128], index: 6, kind: output, shape index: {0}]
  %s7 = inlined_call_operand.vmem [shape: f32[1,128], index: 7, kind: output, shape index: {1}]
  %8 = xla_tuple %s6, %s7
  %s9 = sld [smem:[#allocation0]]
  $region50: #{_bet_forward.1} parent=0
    _
  %s11 = ssub.s32 1, %s9
  %s12 = scalar_select 0, %s11, %s9
  $region1: #{_bet_forward.1} parent=0
    #allocation2 [shape = 'u8[327680]{0}', space=vmem, size = 0x50000, scoped, tag = 'input window, operand 1, single buffered']
    #allocation3 [shape = 's32[1]{0}', space=sflag, size = 0x4, scoped, tag = 'scoped memory for _bet_forward.1']
    #allocation4 [shape = 'u8[65536]{0}', space=vmem, size = 0x10000, scoped, tag = 'input window, operand 3, single buffered']
    #allocation5 [shape = 's32[1]{0}', space=sflag, size = 0x4, scoped, tag = 'scoped memory for _bet_forward.1']
    %13 = vsyncpa [#allocation3], 0
    %14 = vsyncpa [#allocation5], 0
    // Predicated region
    $region2: #{_bet_forward.1} parent=1 // pred_check
      _
    $region3: #{_bet_forward.1} parent=1 // pred_check_branch
      %16 = sbr.rel (0) target = $region5
    $region4: #{_bet_forward.1} parent=1 // pred_region
      _
    $region5: #{_bet_forward.1} parent=1 // pred_fallthru
      _
    // Predicated region
    $region6: #{_bet_forward.1} parent=1 // pred_check
      _
    $region7: #{_bet_forward.1} parent=1 // pred_check_branch
      %18 = sbr.rel (0) target = $region9
    $region8: #{_bet_forward.1} parent=1 // pred_region
      %20 = vsyncadd [#allocation3], 0
      %s21 = sshll.u32 %s1, 4
      %s22 = int_to_ptr.hbm [resolvable:$true] %s21
      %s23 = sshll.u32 [#allocation2], 4
      %s24 = int_to_ptr.vmem [resolvable:$true] %s23
      %29 = dma.hbm_to_vmem [thread:$0]  %s22, 10240, %s24, [#allocation3], 640, 640, 40
    $region9: #{_bet_forward.1} parent=1 // pred_fallthru
      _
    // Predicated region
    $region10: #{_bet_forward.1} parent=1 // pred_check
      _
    $region11: #{_bet_forward.1} parent=1 // pred_check_branch
      %31 = sbr.rel (0) target = $region13
    $region12: #{_bet_forward.1} parent=1 // pred_region
      _
    $region13: #{_bet_forward.1} parent=1 // pred_fallthru
      _
    // Predicated region
    $region14: #{_bet_forward.1} parent=1 // pred_check
      _
    $region15: #{_bet_forward.1} parent=1 // pred_check_branch
      %33 = sbr.rel (0) target = $region17
    $region16: #{_bet_forward.1} parent=1 // pred_region
      %35 = vsyncadd [#allocation5], 0
      %s36 = sshll.u32 %s3, 4
      %s37 = int_to_ptr.hbm [resolvable:$true] %s36
      %s38 = sshll.u32 [#allocation4], 4
      %s39 = int_to_ptr.vmem [resolvable:$true] %s38
      %44 = dma.hbm_to_vmem [thread:$0]  %s37, 2048, %s39, [#allocation5], 128, 128, 8
    $region17: #{_bet_forward.1} parent=1 // pred_fallthru
      _
    // Predicated region
    $region18: #{_bet_forward.1} parent=1 // pred_check
      _
    $region19: #{_bet_forward.1} parent=1 // pred_check_branch
      %46 = sbr.rel (0) target = $region21
    $region20: #{_bet_forward.1} parent=1 // pred_region
      _
    $region21: #{_bet_forward.1} parent=1 // pred_fallthru
      _
    // Predicated region
    $region22: #{_bet_forward.1} parent=1 // pred_check
      _
    $region23: #{_bet_forward.1} parent=1 // pred_check_branch
      %48 = sbr.rel (0) target = $region25
    $region24: #{_bet_forward.1} parent=1 // pred_region
      _
    $region25: #{_bet_forward.1} parent=1 // pred_fallthru
      _
    // Predicated region
    $region26: #{_bet_forward.1} parent=1 // pred_check
      _
    $region27: #{_bet_forward.1} parent=1 // pred_check_branch
      %50 = sbr.rel (0) target = $region29
    $region28: #{_bet_forward.1} parent=1 // pred_region
      %52 = dma.done [#allocation3], 10240
    $region29: #{_bet_forward.1} parent=1 // pred_fallthru
      _
    // Predicated region
    $region30: #{_bet_forward.1} parent=1 // pred_check
      _
    $region31: #{_bet_forward.1} parent=1 // pred_check_branch
      %54 = sbr.rel (0) target = $region33
    $region32: #{_bet_forward.1} parent=1 // pred_region
      %56 = dma.done [#allocation5], 2048
    $region33: #{_bet_forward.1} parent=1 // pred_fallthru
      _
    %v58 = vlaneseq
    %v59 = vand.u32 %v58, 127
    %vm60 = vcmp.lt.s32.totalorder %v59, 32
    %v61 = vsel %vm60, 1, 0
    %v62 = vcvt.s32.f32 %v61
    %v63 = vld [vmem:[%s0] sm:$0xff]
    %v64 = vld [vmem:[%s0 + $0x8] sm:$0xff]
    %v65 = vld [vmem:[#allocation4] sm:$0xff]
    %v66 = vld [vmem:[#allocation4 + $0x8] sm:$0xff]
    %v67 = vld [vmem:[#allocation4 + $0x10] sm:$0xff]
    %v68 = vld [vmem:[#allocation4 + $0x18] sm:$0xff]
    %v69 = vld [vmem:[#allocation4 + $0x20] sm:$0xff]
    %v70 = vld [vmem:[#allocation4 + $0x28] sm:$0xff]
    %v71 = vld [vmem:[#allocation4 + $0x30] sm:$0xff]
    %v72 = vld [vmem:[#allocation4 + $0x38] sm:$0xff]
    %v73 = vld [vmem:[#allocation4 + $0x40] sm:$0xff]
    %v74 = vld [vmem:[#allocation4 + $0x48] sm:$0xff]
    %v75 = vld [vmem:[#allocation4 + $0x50] sm:$0xff]
    %v76 = vld [vmem:[#allocation4 + $0x58] sm:$0xff]
    %v77 = vld [vmem:[#allocation4 + $0x60] sm:$0xff]
    %v78 = vld [vmem:[#allocation4 + $0x68] sm:$0xff]
    %v79 = vld [vmem:[#allocation4 + $0x70] sm:$0xff]
    %v80 = vld [vmem:[#allocation4 + $0x78] sm:$0xff]
    %v81 = vld [vmem:[%s4] sm:$0xff]
    %v82 = vld [vmem:[%s4 + $0x8] sm:$0xff]
    %v83 = vld [vmem:[%s5] sm:$0xff]
    %v84 = vld [vmem:[%s5 + $0x8] sm:$0xff]
    %v85 = vld [vmem:[#allocation2] sm:$0xf]
    %v86 = vld [vmem:[#allocation2 + $0x28] sm:$0xf]
    %v87 = vld [vmem:[#allocation2 + $0x50] sm:$0xf]
    %v88 = vld [vmem:[#allocation2 + $0x78] sm:$0xf]
    %v89 = vld [vmem:[#allocation2 + $0xa0] sm:$0xf]
    %v90 = vld [vmem:[#allocation2 + $0xc8] sm:$0xf]
    %v91 = vld [vmem:[#allocation2 + $0xf0] sm:$0xf]
    %v92 = vld [vmem:[#allocation2 + $0x118] sm:$0xf]
    %v93 = vld [vmem:[#allocation2 + $0x140] sm:$0xf]
    %v94 = vld [vmem:[#allocation2 + $0x168] sm:$0xf]
    %v95 = vld [vmem:[#allocation2 + $0x190] sm:$0xf]
    %v96 = vld [vmem:[#allocation2 + $0x1b8] sm:$0xf]
    %v97 = vld [vmem:[#allocation2 + $0x1e0] sm:$0xf]
    %v98 = vld [vmem:[#allocation2 + $0x208] sm:$0xf]
    %v99 = vld [vmem:[#allocation2 + $0x230] sm:$0xf]
    %v100 = vld [vmem:[#allocation2 + $0x258] sm:$0xf]
    %v101 = vpack.c.bf16 %v64, %v63
    %v102 = vld [vmem:[%s2] sm:$0x1]
    %v103 = vperm.slane %v102, 0
    %v120 = vunpack.c.l.b16 %v85
    %v121 = vunpack.c.l.b16 %v86
    %v122 = vunpack.c.l.b16 %v87
    %v123 = vunpack.c.l.b16 %v88
    %v124 = vunpack.c.l.b16 %v89
    %v125 = vunpack.c.l.b16 %v90
    %v126 = vunpack.c.l.b16 %v91
    %v127 = vunpack.c.l.b16 %v92
    %v128 = vunpack.c.l.b16 %v93
    %v129 = vunpack.c.l.b16 %v94
    %v130 = vunpack.c.l.b16 %v95
    %v131 = vunpack.c.l.b16 %v96
    %v132 = vunpack.c.l.b16 %v97
    %v133 = vunpack.c.l.b16 %v98
    %v134 = vunpack.c.l.b16 %v99
    %v135 = vunpack.c.l.b16 %v100
    %v136 = vpack.c.b16 %v121, %v120
    %v137 = vpack.c.b16 %v123, %v122
    %v138 = vpack.c.b16 %v125, %v124
    %v139 = vpack.c.b16 %v127, %v126
    %v140 = vpack.c.b16 %v129, %v128
    %v141 = vpack.c.b16 %v131, %v130
    %v142 = vpack.c.b16 %v133, %v132
    %v143 = vpack.c.b16 %v135, %v134
    %152 = vmatpush.bf16.msra.mxu0 %v143
    %153 = vmatpush.bf16.msra.mxu0 %v142
    %154 = vmatpush.bf16.msra.mxu0 %v141
    %155 = vmatpush.bf16.msra.mxu0 %v140
    %156 = vmatpush.bf16.msra.mxu0 %v139
    %157 = vmatpush.bf16.msra.mxu0 %v138
    %158 = vmatpush.bf16.msra.mxu0 %v137
    %159 = vmatpush.bf16.msra.mxu0 %v136
    %160 = vmatmul.bf16.gmra.mxu0 %v101
    %v161 = vpop.f32.mrf.mxu0
    %v162 = vadd.f32 %v103, %v161
    %v163 = vpop.f32.mrf.mxu0
    %v164 = vadd.f32 %v103, %v163
    %165 = vdwg.mxu0
    %166 = vadd.xlane.f32.xlu0 %v162
    %v167 = vpop.xlane.xlu0 %166
    %168 = vadd.xlane.f32.xlu0 %v164
    %v169 = vpop.xlane.xlu0 %168
    %v170 = vmul.f32 %v167, 0.03125
    %v171 = vmul.f32 %v169, 0.03125
    %v172 = vsub.f32 %v162, %v170
    %v173 = vsub.f32 %v164, %v171
    %v174 = vmul.f32 %v172, %v172
    %v175 = vmul.f32 %v173, %v173
    %v176 = vmul.f32 %v174, %v62
    %v177 = vmul.f32 %v175, %v62
    %178 = vadd.xlane.f32.xlu0 %v176
    %v179 = vpop.xlane.xlu0 %178
    %180 = vadd.xlane.f32.xlu0 %v177
    %v181 = vpop.xlane.xlu0 %180
    %v182 = vmul.f32 %v179, 0.03125
    %v183 = vmul.f32 %v181, 0.03125
    %v184 = vadd.f32 %v182, 1e-05
    %v185 = vadd.f32 %v183, 1e-05
    %v186 = vrsqrt.pop %v184
    %v187 = vmul.f32 %v186, %v184
    %v188 = vmul.f32 %v187, %v186
    %v189 = vmul.f32 0.5, %v188
    %v190 = vsub.f32 1.5, %v189
    %v191 = vmul.f32 %v186, %v190
    %vm192 = vweird.f32 %v184
    %vm193 = vweird.f32 %v186
    %vm194 = vmor %vm192, %vm193
    %v195 = vsel %vm194, %v186, %v191
    %v196 = vrsqrt.pop %v185
    %v197 = vmul.f32 %v196, %v185
    %v198 = vmul.f32 %v197, %v196
    %v199 = vmul.f32 0.5, %v198
    %v200 = vsub.f32 1.5, %v199
    %v201 = vmul.f32 %v196, %v200
    %vm202 = vweird.f32 %v185
    %vm203 = vweird.f32 %v196
    %vm204 = vmor %vm202, %vm203
    %v205 = vsel %vm204, %v196, %v201
    %v206 = vmul.f32 %v172, %v195
    %v207 = vmul.f32 %v173, %v205
    %v208 = vld [vmem:[%s2 + $0x1] sm:$0x1]
    %v209 = vperm.slane %v208, 0
    %v210 = vmul.f32 %v206, %v209
    %v211 = vmul.f32 %v207, %v209
    %v212 = vld [vmem:[%s2 + $0x2] sm:$0x1]
    %v213 = vperm.slane %v212, 0
    %v214 = vadd.f32 %v210, %v213
    %v215 = vadd.f32 %v211, %v213
    %v216 = vld [vmem:[#allocation2 + $0x4] sm:$0xff]
    %v217 = vld [vmem:[#allocation2 + $0xc] sm:$0xf]
    %v218 = vld [vmem:[#allocation2 + $0x2c] sm:$0xff]
    %v219 = vld [vmem:[#allocation2 + $0x34] sm:$0xf]
    %v220 = vld [vmem:[#allocation2 + $0x54] sm:$0xff]
    %v221 = vld [vmem:[#allocation2 + $0x5c] sm:$0xf]
    %v222 = vld [vmem:[#allocation2 + $0x7c] sm:$0xff]
    %v223 = vld [vmem:[#allocation2 + $0x84] sm:$0xf]
    %v224 = vld [vmem:[#allocation2 + $0xa4] sm:$0xff]
    %v225 = vld [vmem:[#allocation2 + $0xac] sm:$0xf]
    %v226 = vld [vmem:[#allocation2 + $0xcc] sm:$0xff]
    %v227 = vld [vmem:[#allocation2 + $0xd4] sm:$0xf]
    %v228 = vld [vmem:[#allocation2 + $0xf4] sm:$0xff]
    %v229 = vld [vmem:[#allocation2 + $0xfc] sm:$0xf]
    %v230 = vld [vmem:[#allocation2 + $0x11c] sm:$0xff]
    %v231 = vld [vmem:[#allocation2 + $0x124] sm:$0xf]
    %v232 = vld [vmem:[#allocation2 + $0x144] sm:$0xff]
    %v233 = vld [vmem:[#allocation2 + $0x14c] sm:$0xf]
    %v234 = vld [vmem:[#allocation2 + $0x16c] sm:$0xff]
    %v235 = vld [vmem:[#allocation2 + $0x174] sm:$0xf]
    %v236 = vld [vmem:[#allocation2 + $0x194] sm:$0xff]
    %v237 = vld [vmem:[#allocation2 + $0x19c] sm:$0xf]
    %v238 = vld [vmem:[#allocation2 + $0x1bc] sm:$0xff]
    %v239 = vld [vmem:[#allocation2 + $0x1c4] sm:$0xf]
    %v240 = vld [vmem:[#allocation2 + $0x1e4] sm:$0xff]
    %v241 = vld [vmem:[#allocation2 + $0x1ec] sm:$0xf]
    %v242 = vld [vmem:[#allocation2 + $0x20c] sm:$0xff]
    %v243 = vld [vmem:[#allocation2 + $0x214] sm:$0xf]
    %v244 = vld [vmem:[#allocation2 + $0x234] sm:$0xff]
    %v245 = vld [vmem:[#allocation2 + $0x23c] sm:$0xf]
    %v246 = vld [vmem:[#allocation2 + $0x25c] sm:$0xff]
    %v247 = vld [vmem:[#allocation2 + $0x264] sm:$0xf]
    %v248 = vpack.c.bf16 %v215, %v214
    %v281 = vunpack.c.l.b16 %v216
    %v282 = vunpack.c.h.b16 %v216
    %v283 = vunpack.c.l.b16 %v217
    %v284 = vunpack.c.l.b16 %v218
    %v285 = vunpack.c.h.b16 %v218
    %v286 = vunpack.c.l.b16 %v219
    %v287 = vunpack.c.l.b16 %v220
    %v288 = vunpack.c.h.b16 %v220
    %v289 = vunpack.c.l.b16 %v221
    %v290 = vunpack.c.l.b16 %v222
    %v291 = vunpack.c.h.b16 %v222
    %v292 = vunpack.c.l.b16 %v223
    %v293 = vunpack.c.l.b16 %v224
    %v294 = vunpack.c.h.b16 %v224
    %v295 = vunpack.c.l.b16 %v225
    %v296 = vunpack.c.l.b16 %v226
    %v297 = vunpack.c.h.b16 %v226
    %v298 = vunpack.c.l.b16 %v227
    %v299 = vunpack.c.l.b16 %v228
    %v300 = vunpack.c.h.b16 %v228
    %v301 = vunpack.c.l.b16 %v229
    %v302 = vunpack.c.l.b16 %v230
    %v303 = vunpack.c.h.b16 %v230
    %v304 = vunpack.c.l.b16 %v231
    %v305 = vunpack.c.l.b16 %v232
    %v306 = vunpack.c.h.b16 %v232
    %v307 = vunpack.c.l.b16 %v233
    %v308 = vunpack.c.l.b16 %v234
    %v309 = vunpack.c.h.b16 %v234
    %v310 = vunpack.c.l.b16 %v235
    %v311 = vunpack.c.l.b16 %v236
    %v312 = vunpack.c.h.b16 %v236
    %v313 = vunpack.c.l.b16 %v237
    %v314 = vunpack.c.l.b16 %v238
    %v315 = vunpack.c.h.b16 %v238
    %v316 = vunpack.c.l.b16 %v239
    %v317 = vunpack.c.l.b16 %v240
    %v318 = vunpack.c.h.b16 %v240
    %v319 = vunpack.c.l.b16 %v241
    %v320 = vunpack.c.l.b16 %v242
    %v321 = vunpack.c.h.b16 %v242
    %v322 = vunpack.c.l.b16 %v243
    %v323 = vunpack.c.l.b16 %v244
    %v324 = vunpack.c.h.b16 %v244
    %v325 = vunpack.c.l.b16 %v245
    %v326 = vunpack.c.l.b16 %v246
    %v327 = vunpack.c.h.b16 %v246
    %v328 = vunpack.c.l.b16 %v247
    %v329 = vpack.c.b16 %v284, %v281
    %v330 = vpack.c.b16 %v285, %v282
    %v331 = vpack.c.b16 %v286, %v283
    %v332 = vpack.c.b16 %v290, %v287
    %v333 = vpack.c.b16 %v291, %v288
    %v334 = vpack.c.b16 %v292, %v289
    %v335 = vpack.c.b16 %v296, %v293
    %v336 = vpack.c.b16 %v297, %v294
    %v337 = vpack.c.b16 %v298, %v295
    %v338 = vpack.c.b16 %v302, %v299
    %v339 = vpack.c.b16 %v303, %v300
    %v340 = vpack.c.b16 %v304, %v301
    %v341 = vpack.c.b16 %v308, %v305
    %v342 = vpack.c.b16 %v309, %v306
    %v343 = vpack.c.b16 %v310, %v307
    %v344 = vpack.c.b16 %v314, %v311
    %v345 = vpack.c.b16 %v315, %v312
    %v346 = vpack.c.b16 %v316, %v313
    %v347 = vpack.c.b16 %v320, %v317
    %v348 = vpack.c.b16 %v321, %v318
    %v349 = vpack.c.b16 %v322, %v319
    %v350 = vpack.c.b16 %v326, %v323
    %v351 = vpack.c.b16 %v327, %v324
    %v352 = vpack.c.b16 %v328, %v325
    %377 = vmatpush.bf16.msra.mxu0 %v350
    %378 = vmatpush.bf16.msra.mxu0 %v347
    %379 = vmatpush.bf16.msra.mxu0 %v344
    %380 = vmatpush.bf16.msra.mxu0 %v341
    %381 = vmatpush.bf16.msra.mxu0 %v338
    %382 = vmatpush.bf16.msra.mxu0 %v335
    %383 = vmatpush.bf16.msra.mxu0 %v332
    %384 = vmatpush.bf16.msra.mxu0 %v329
    %385 = vmatmul.bf16.gmra.mxu0 %v248
    %v386 = vpop.f32.mrf.mxu0
    %v387 = vadd.f32 0.0, %v386
    %v388 = vpop.f32.mrf.mxu0
    %v389 = vadd.f32 0.0, %v388
    %390 = vdwg.mxu0
    %391 = vmatpush.bf16.msra.mxu0 %v351
    %392 = vmatpush.bf16.msra.mxu0 %v348
    %393 = vmatpush.bf16.msra.mxu0 %v345
    %394 = vmatpush.bf16.msra.mxu0 %v342
    %395 = vmatpush.bf16.msra.mxu0 %v339
    %396 = vmatpush.bf16.msra.mxu0 %v336
    %397 = vmatpush.bf16.msra.mxu0 %v333
    %398 = vmatpush.bf16.msra.mxu0 %v330
    %399 = vmatmul.bf16.gmra.mxu0 %v248
    %v400 = vpop.f32.mrf.mxu0
    %v401 = vadd.f32 0.0, %v400
    %v402 = vpop.f32.mrf.mxu0
    %v403 = vadd.f32 0.0, %v402
    %404 = vdwg.mxu0
    %405 = vmatpush.bf16.msra.mxu0 %v352
    %406 = vmatpush.bf16.msra.mxu0 %v349
    %407 = vmatpush.bf16.msra.mxu0 %v346
    %408 = vmatpush.bf16.msra.mxu0 %v343
    %409 = vmatpush.bf16.msra.mxu0 %v340
    %410 = vmatpush.bf16.msra.mxu0 %v337
    %411 = vmatpush.bf16.msra.mxu0 %v334
    %412 = vmatpush.bf16.msra.mxu0 %v331
    %413 = vmatmul.bf16.gmra.mxu0 %v248
    %v414 = vpop.f32.mrf.mxu0
    %v415 = vadd.f32 0.0, %v414
    %v416 = vpop.f32.mrf.mxu0
    %v417 = vadd.f32 0.0, %v416
    %418 = vdwg.mxu0
    %v419 = vpack.c.bf16 %v387, %v387
    %v420 = vpack.c.bf16 %v389, %v389
    %v421 = vpack.c.bf16 %v401, %v401
    %v422 = vpack.c.bf16 %v403, %v403
    %423 = vmatpush.bf16.xpose.msra.mxu0 0
    %424 = vmatpush.bf16.xpose.msra.mxu0 0
    %425 = vmatpush.bf16.xpose.msra.mxu0 0
    %426 = vmatpush.bf16.xpose.msra.mxu0 0
    %427 = vmatpush.bf16.xpose.msra.mxu0 0
    %428 = vmatpush.bf16.xpose.msra.mxu0 0
    %429 = vmatpush.bf16.xpose.msra.mxu0 0
    %430 = vmatpush.bf16.xpose.msra.mxu0 %v421
    %431 = vmatmul.bf16.gmra.mxu0 %v419
    %v432 = vpop.f32.mrf.mxu0
    %v433 = vadd.f32 0.0, %v432
    %v434 = vpop.f32.mrf.mxu0
    %435 = vdwg.mxu0
    %436 = vmatpush.bf16.xpose.msra.mxu0 0
    %437 = vmatpush.bf16.xpose.msra.mxu0 0
    %438 = vmatpush.bf16.xpose.msra.mxu0 0
    %439 = vmatpush.bf16.xpose.msra.mxu0 0
    %440 = vmatpush.bf16.xpose.msra.mxu0 0
    %441 = vmatpush.bf16.xpose.msra.mxu0 0
    %442 = vmatpush.bf16.xpose.msra.mxu0 0
    %443 = vmatpush.bf16.xpose.msra.mxu0 %v422
    %444 = vmatmul.bf16.gmra.mxu0 %v420
    %v445 = vpop.f32.mrf.mxu0
    %v446 = vadd.f32 0.0, %v445
    %v447 = vpop.f32.mrf.mxu0
    %448 = vdwg.mxu0
    %v449 = vmul.f32 %v433, 0.17677669
    %v450 = vmul.f32 %v446, 0.17677669
    %v451 = vlaneseq
    %v452 = vshrl.u32 %v451, 7
    %vm453 = vcmp.le.s32.totalorder %v59, %v452
    %v454 = vsel %vm453, %v449, -1e+30
    %v455 = vsel %vm453, %v450, -1e+30
    %vm456 = vcmask 64512
    %v457 = vsel %vm456, %v454, -inf
    %458 = vmax.xlane.f32.xlu0 %v457
    %v459 = vpop.xlane.xlu0 %458
    %v460 = vsel %vm456, %v455, -inf
    %461 = vmax.xlane.f32.xlu0 %v460
    %v462 = vpop.xlane.xlu0 %461
    %v463 = vsub.f32 %v454, %v459
    %v464 = vsub.f32 %v455, %v462
    %v465 = vmul.f32 %v463, 1.442695
    %v466 = vpow.pop %v465
    %v467 = vmul.f32 %v464, 1.442695
    %v468 = vpow.pop %v467
    %v469 = vsel %vm456, %v466, 0.0
    %470 = vadd.xlane.f32.xlu0 %v469
    %v471 = vpop.xlane.xlu0 %470
    %v472 = vsel %vm456, %v468, 0.0
    %473 = vadd.xlane.f32.xlu0 %v472
    %v474 = vpop.xlane.xlu0 %473
    %v475 = vrcp.pop %v471
    %v476 = vrcp.pop %v474
    %v477 = vmul.f32 %v466, %v475
    %v478 = vmul.f32 %v468, %v476
    %v479 = vpack.c.bf16 %v477, %v477
    %v480 = vpack.c.bf16 %v478, %v478
    %v481 = vpack.c.bf16 %v415, %v415
    %v482 = vpack.c.bf16 %v417, %v417
    %v484 = vsel %vm456, %v479, 0
    %vm486 = vcmask 1043456
    %v488 = vsel %vm486, %v481, 0
    %490 = vmatpush.bf16.msra.mxu0 0
    %491 = vmatpush.bf16.msra.mxu0 0
    %492 = vmatpush.bf16.msra.mxu0 0
    %493 = vmatpush.bf16.msra.mxu0 0
    %494 = vmatpush.bf16.msra.mxu0 0
    %495 = vmatpush.bf16.msra.mxu0 0
    %496 = vmatpush.bf16.msra.mxu0 0
    %497 = vmatpush.bf16.msra.mxu0 %v488
    %498 = vmatmul.bf16.gmra.mxu0 %v484
    %v499 = vpop.f32.mrf.mxu0
    %v500 = vadd.f32 0.0, %v499
    %v501 = vpop.f32.mrf.mxu0
    %502 = vdwg.mxu0
    %v504 = vsel %vm456, %v480, 0
    %v507 = vsel %vm486, %v482, 0
    %509 = vmatpush.bf16.msra.mxu0 0
    %510 = vmatpush.bf16.msra.mxu0 0
    %511 = vmatpush.bf16.msra.mxu0 0
    %512 = vmatpush.bf16.msra.mxu0 0
    %513 = vmatpush.bf16.msra.mxu0 0
    %514 = vmatpush.bf16.msra.mxu0 0
    %515 = vmatpush.bf16.msra.mxu0 0
    %516 = vmatpush.bf16.msra.mxu0 %v507
    %517 = vmatmul.bf16.gmra.mxu0 %v504
    %v518 = vpop.f32.mrf.mxu0
    %v519 = vadd.f32 0.0, %v518
    %v520 = vpop.f32.mrf.mxu0
    %521 = vdwg.mxu0
    %v522 = vld [vmem:[#allocation2 + $0x10] sm:$0xf]
    %v523 = vld [vmem:[#allocation2 + $0x38] sm:$0xf]
    %v524 = vld [vmem:[#allocation2 + $0x60] sm:$0xf]
    %v525 = vld [vmem:[#allocation2 + $0x88] sm:$0xf]
    %v526 = vld [vmem:[#allocation2 + $0xb0] sm:$0xf]
    %v527 = vld [vmem:[#allocation2 + $0xd8] sm:$0xf]
    %v528 = vld [vmem:[#allocation2 + $0x100] sm:$0xf]
    %v529 = vld [vmem:[#allocation2 + $0x128] sm:$0xf]
    %v530 = vld [vmem:[#allocation2 + $0x150] sm:$0xf]
    %v531 = vld [vmem:[#allocation2 + $0x178] sm:$0xf]
    %v532 = vld [vmem:[#allocation2 + $0x1a0] sm:$0xf]
    %v533 = vld [vmem:[#allocation2 + $0x1c8] sm:$0xf]
    %v534 = vld [vmem:[#allocation2 + $0x1f0] sm:$0xf]
    %v535 = vld [vmem:[#allocation2 + $0x218] sm:$0xf]
    %v536 = vld [vmem:[#allocation2 + $0x240] sm:$0xf]
    %v537 = vld [vmem:[#allocation2 + $0x268] sm:$0xf]
    %v538 = vpack.c.bf16 %v519, %v500
    %v555 = vunpack.c.l.b16 %v522
    %v556 = vunpack.c.l.b16 %v523
    %v557 = vunpack.c.l.b16 %v524
    %v558 = vunpack.c.l.b16 %v525
    %v559 = vunpack.c.l.b16 %v526
    %v560 = vunpack.c.l.b16 %v527
    %v561 = vunpack.c.l.b16 %v528
    %v562 = vunpack.c.l.b16 %v529
    %v563 = vunpack.c.l.b16 %v530
    %v564 = vunpack.c.l.b16 %v531
    %v565 = vunpack.c.l.b16 %v532
    %v566 = vunpack.c.l.b16 %v533
    %v567 = vunpack.c.l.b16 %v534
    %v568 = vunpack.c.l.b16 %v535
    %v569 = vunpack.c.l.b16 %v536
    %v570 = vunpack.c.l.b16 %v537
    %v571 = vpack.c.b16 %v556, %v555
    %v572 = vpack.c.b16 %v558, %v557
    %v573 = vpack.c.b16 %v560, %v559
    %v574 = vpack.c.b16 %v562, %v561
    %v575 = vpack.c.b16 %v564, %v563
    %v576 = vpack.c.b16 %v566, %v565
    %v577 = vpack.c.b16 %v568, %v567
    %v578 = vpack.c.b16 %v570, %v569
    %587 = vmatpush.bf16.msra.mxu0 %v578
    %588 = vmatpush.bf16.msra.mxu0 %v577
    %589 = vmatpush.bf16.msra.mxu0 %v576
    %590 = vmatpush.bf16.msra.mxu0 %v575
    %591 = vmatpush.bf16.msra.mxu0 %v574
    %592 = vmatpush.bf16.msra.mxu0 %v573
    %593 = vmatpush.bf16.msra.mxu0 %v572
    %594 = vmatpush.bf16.msra.mxu0 %v571
    %595 = vmatmul.bf16.gmra.mxu0 %v538
    %v596 = vpop.f32.mrf.mxu0
    %v597 = vadd.f32 0.0, %v596
    %v598 = vpop.f32.mrf.mxu0
    %v599 = vadd.f32 0.0, %v598
    %600 = vdwg.mxu0
    %v601 = vadd.f32 %v162, %v597
    %v602 = vadd.f32 %v164, %v599
    %603 = vadd.xlane.f32.xlu0 %v601
    %v604 = vpop.xlane.xlu0 %603
    %605 = vadd.xlane.f32.xlu0 %v602
    %v606 = vpop.xlane.xlu0 %605
    %v607 = vmul.f32 %v604, 0.03125
    %v608 = vmul.f32 %v606, 0.03125
    %v609 = vsub.f32 %v601, %v607
    %v610 = vsub.f32 %v602, %v608
    %v611 = vmul.f32 %v609, %v609
    %v612 = vmul.f32 %v610, %v610
    %v613 = vmul.f32 %v611, %v62
    %v614 = vmul.f32 %v612, %v62
    %615 = vadd.xlane.f32.xlu0 %v613
    %v616 = vpop.xlane.xlu0 %615
    %617 = vadd.xlane.f32.xlu0 %v614
    %v618 = vpop.xlane.xlu0 %617
    %v619 = vmul.f32 %v616, 0.03125
    %v620 = vmul.f32 %v618, 0.03125
    %v621 = vadd.f32 %v619, 1e-05
    %v622 = vadd.f32 %v620, 1e-05
    %v623 = vrsqrt.pop %v621
    %v624 = vmul.f32 %v623, %v621
    %v625 = vmul.f32 %v624, %v623
    %v626 = vmul.f32 0.5, %v625
    %v627 = vsub.f32 1.5, %v626
    %v628 = vmul.f32 %v623, %v627
    %vm629 = vweird.f32 %v621
    %vm630 = vweird.f32 %v623
    %vm631 = vmor %vm629, %vm630
    %v632 = vsel %vm631, %v623, %v628
    %v633 = vrsqrt.pop %v622
    %v634 = vmul.f32 %v633, %v622
    %v635 = vmul.f32 %v634, %v633
    %v636 = vmul.f32 0.5, %v635
    %v637 = vsub.f32 1.5, %v636
    %v638 = vmul.f32 %v633, %v637
    %vm639 = vweird.f32 %v622
    %vm640 = vweird.f32 %v633
    %vm641 = vmor %vm639, %vm640
    %v642 = vsel %vm641, %v633, %v638
    %v643 = vmul.f32 %v609, %v632
    %v644 = vmul.f32 %v610, %v642
    %v645 = vld [vmem:[%s2 + $0x3] sm:$0x1]
    %v646 = vperm.slane %v645, 0
    %v647 = vmul.f32 %v643, %v646
    %v648 = vmul.f32 %v644, %v646
    %v649 = vld [vmem:[%s2 + $0x4] sm:$0x1]
    %v650 = vperm.slane %v649, 0
    %v651 = vadd.f32 %v647, %v650
    %v652 = vadd.f32 %v648, %v650
    %v653 = vld [vmem:[#allocation2 + $0x14] sm:$0xf]
    %v654 = vld [vmem:[#allocation2 + $0x3c] sm:$0xf]
    %v655 = vld [vmem:[#allocation2 + $0x64] sm:$0xf]
    %v656 = vld [vmem:[#allocation2 + $0x8c] sm:$0xf]
    %v657 = vld [vmem:[#allocation2 + $0xb4] sm:$0xf]
    %v658 = vld [vmem:[#allocation2 + $0xdc] sm:$0xf]
    %v659 = vld [vmem:[#allocation2 + $0x104] sm:$0xf]
    %v660 = vld [vmem:[#allocation2 + $0x12c] sm:$0xf]
    %v661 = vld [vmem:[#allocation2 + $0x154] sm:$0xf]
    %v662 = vld [vmem:[#allocation2 + $0x17c] sm:$0xf]
    %v663 = vld [vmem:[#allocation2 + $0x1a4] sm:$0xf]
    %v664 = vld [vmem:[#allocation2 + $0x1cc] sm:$0xf]
    %v665 = vld [vmem:[#allocation2 + $0x1f4] sm:$0xf]
    %v666 = vld [vmem:[#allocation2 + $0x21c] sm:$0xf]
    %v667 = vld [vmem:[#allocation2 + $0x244] sm:$0xf]
    %v668 = vld [vmem:[#allocation2 + $0x26c] sm:$0xf]
    %v669 = vpack.c.bf16 %v652, %v651
    %v670 = vld [vmem:[%s2 + $0x7] sm:$0x1]
    %v671 = vperm.slane %v670, 0
    %v688 = vunpack.c.l.b16 %v653
    %v689 = vunpack.c.l.b16 %v654
    %v690 = vunpack.c.l.b16 %v655
    %v691 = vunpack.c.l.b16 %v656
    %v692 = vunpack.c.l.b16 %v657
    %v693 = vunpack.c.l.b16 %v658
    %v694 = vunpack.c.l.b16 %v659
    %v695 = vunpack.c.l.b16 %v660
    %v696 = vunpack.c.l.b16 %v661
    %v697 = vunpack.c.l.b16 %v662
    %v698 = vunpack.c.l.b16 %v663
    %v699 = vunpack.c.l.b16 %v664
    %v700 = vunpack.c.l.b16 %v665
    %v701 = vunpack.c.l.b16 %v666
    %v702 = vunpack.c.l.b16 %v667
    %v703 = vunpack.c.l.b16 %v668
    %v704 = vpack.c.b16 %v689, %v688
    %v705 = vpack.c.b16 %v691, %v690
    %v706 = vpack.c.b16 %v693, %v692
    %v707 = vpack.c.b16 %v695, %v694
    %v708 = vpack.c.b16 %v697, %v696
    %v709 = vpack.c.b16 %v699, %v698
    %v710 = vpack.c.b16 %v701, %v700
    %v711 = vpack.c.b16 %v703, %v702
    %720 = vmatpush.bf16.msra.mxu0 %v711
    %721 = vmatpush.bf16.msra.mxu0 %v710
    %722 = vmatpush.bf16.msra.mxu0 %v709
    %723 = vmatpush.bf16.msra.mxu0 %v708
    %724 = vmatpush.bf16.msra.mxu0 %v707
    %725 = vmatpush.bf16.msra.mxu0 %v706
    %726 = vmatpush.bf16.msra.mxu0 %v705
    %727 = vmatpush.bf16.msra.mxu0 %v704
    %728 = vmatmul.bf16.gmra.mxu0 %v669
    %v729 = vpop.f32.mrf.mxu0
    %v730 = vadd.f32 %v671, %v729
    %v731 = vpop.f32.mrf.mxu0
    %v732 = vadd.f32 %v671, %v731
    %733 = vdwg.mxu0
    %v734 = vmul.f32 %v730, %v730
    %v735 = vmul.f32 %v732, %v732
    %v736 = vmul.f32 %v730, %v734
    %v737 = vmul.f32 %v732, %v735
    %v738 = vmul.f32 %v736, 0.044715
    %v739 = vmul.f32 %v737, 0.044715
    %v740 = vadd.f32 %v730, %v738
    %v741 = vadd.f32 %v732, %v739
    %v742 = vmul.f32 %v740, 0.7978846
    %v743 = vmul.f32 %v741, 0.7978846
    %v744 = vtanh.pop %v742
    %v745 = vtanh.pop %v743
    %v746 = vadd.f32 %v744, 1.0
    %v747 = vadd.f32 %v745, 1.0
    %v748 = vmul.f32 %v746, 0.5
    %v749 = vmul.f32 %v747, 0.5
    %v750 = vmul.f32 %v730, %v748
    %v751 = vmul.f32 %v732, %v749
    %v752 = vld [vmem:[#allocation2 + $0x18] sm:$0xf]
    %v753 = vld [vmem:[#allocation2 + $0x40] sm:$0xf]
    %v754 = vld [vmem:[#allocation2 + $0x68] sm:$0xf]
    %v755 = vld [vmem:[#allocation2 + $0x90] sm:$0xf]
    %v756 = vld [vmem:[#allocation2 + $0xb8] sm:$0xf]
    %v757 = vld [vmem:[#allocation2 + $0xe0] sm:$0xf]
    %v758 = vld [vmem:[#allocation2 + $0x108] sm:$0xf]
    %v759 = vld [vmem:[#allocation2 + $0x130] sm:$0xf]
    %v760 = vld [vmem:[#allocation2 + $0x158] sm:$0xf]
    %v761 = vld [vmem:[#allocation2 + $0x180] sm:$0xf]
    %v762 = vld [vmem:[#allocation2 + $0x1a8] sm:$0xf]
    %v763 = vld [vmem:[#allocation2 + $0x1d0] sm:$0xf]
    %v764 = vld [vmem:[#allocation2 + $0x1f8] sm:$0xf]
    %v765 = vld [vmem:[#allocation2 + $0x220] sm:$0xf]
    %v766 = vld [vmem:[#allocation2 + $0x248] sm:$0xf]
    %v767 = vld [vmem:[#allocation2 + $0x270] sm:$0xf]
    %v768 = vpack.c.bf16 %v751, %v750
    %v785 = vunpack.c.l.b16 %v752
    %v786 = vunpack.c.l.b16 %v753
    %v787 = vunpack.c.l.b16 %v754
    %v788 = vunpack.c.l.b16 %v755
    %v789 = vunpack.c.l.b16 %v756
    %v790 = vunpack.c.l.b16 %v757
    %v791 = vunpack.c.l.b16 %v758
    %v792 = vunpack.c.l.b16 %v759
    %v793 = vunpack.c.l.b16 %v760
    %v794 = vunpack.c.l.b16 %v761
    %v795 = vunpack.c.l.b16 %v762
    %v796 = vunpack.c.l.b16 %v763
    %v797 = vunpack.c.l.b16 %v764
    %v798 = vunpack.c.l.b16 %v765
    %v799 = vunpack.c.l.b16 %v766
    %v800 = vunpack.c.l.b16 %v767
    %v801 = vpack.c.b16 %v786, %v785
    %v802 = vpack.c.b16 %v788, %v787
    %v803 = vpack.c.b16 %v790, %v789
    %v804 = vpack.c.b16 %v792, %v791
    %v805 = vpack.c.b16 %v794, %v793
    %v806 = vpack.c.b16 %v796, %v795
    %v807 = vpack.c.b16 %v798, %v797
    %v808 = vpack.c.b16 %v800, %v799
    %817 = vmatpush.bf16.msra.mxu0 %v808
    %818 = vmatpush.bf16.msra.mxu0 %v807
    %819 = vmatpush.bf16.msra.mxu0 %v806
    %820 = vmatpush.bf16.msra.mxu0 %v805
    %821 = vmatpush.bf16.msra.mxu0 %v804
    %822 = vmatpush.bf16.msra.mxu0 %v803
    %823 = vmatpush.bf16.msra.mxu0 %v802
    %824 = vmatpush.bf16.msra.mxu0 %v801
    %825 = vmatmul.bf16.gmra.mxu0 %v768
    %v826 = vpop.f32.mrf.mxu0
    %v827 = vadd.f32 0.0, %v826
    %v828 = vpop.f32.mrf.mxu0
    %v829 = vadd.f32 0.0, %v828
    %830 = vdwg.mxu0
    %v831 = vadd.f32 %v601, %v827
    %v832 = vadd.f32 %v602, %v829
    %v833 = vld [vmem:[%s2 + $0x8] sm:$0x1]
    %v834 = vperm.slane %v833, 0
    %v835 = vadd.f32 %v831, %v834
    %v836 = vadd.f32 %v832, %v834
    %837 = vadd.xlane.f32.xlu0 %v835
    %v838 = vpop.xlane.xlu0 %837
    %839 = vadd.xlane.f32.xlu0 %v836
    %v840 = vpop.xlane.xlu0 %839
    %v841 = vmul.f32 %v838, 0.03125
    %v842 = vmul.f32 %v840, 0.03125
    %v843 = vsub.f32 %v835, %v841
    %v844 = vsub.f32 %v836, %v842
    %v845 = vmul.f32 %v843, %v843
    %v846 = vmul.f32 %v844, %v844
    %v847 = vmul.f32 %v845, %v62
    %v848 = vmul.f32 %v846, %v62
    %849 = vadd.xlane.f32.xlu0 %v847
    %v850 = vpop.xlane.xlu0 %849
    %851 = vadd.xlane.f32.xlu0 %v848
    %v852 = vpop.xlane.xlu0 %851
    %v853 = vmul.f32 %v850, 0.03125
    %v854 = vmul.f32 %v852, 0.03125
    %v855 = vadd.f32 %v853, 1e-05
    %v856 = vadd.f32 %v854, 1e-05
    %v857 = vrsqrt.pop %v855
    %v858 = vmul.f32 %v857, %v855
    %v859 = vmul.f32 %v858, %v857
    %v860 = vmul.f32 0.5, %v859
    %v861 = vsub.f32 1.5, %v860
    %v862 = vmul.f32 %v857, %v861
    %vm863 = vweird.f32 %v855
    %vm864 = vweird.f32 %v857
    %vm865 = vmor %vm863, %vm864
    %v866 = vsel %vm865, %v857, %v862
    %v867 = vrsqrt.pop %v856
    %v868 = vmul.f32 %v867, %v856
    %v869 = vmul.f32 %v868, %v867
    %v870 = vmul.f32 0.5, %v869
    %v871 = vsub.f32 1.5, %v870
    %v872 = vmul.f32 %v867, %v871
    %vm873 = vweird.f32 %v856
    %vm874 = vweird.f32 %v867
    %vm875 = vmor %vm873, %vm874
    %v876 = vsel %vm875, %v867, %v872
    %v877 = vmul.f32 %v843, %v866
    %v878 = vmul.f32 %v844, %v876
    %v879 = vld [vmem:[%s2 + $0x5] sm:$0x1]
    %v880 = vperm.slane %v879, 0
    %v881 = vmul.f32 %v877, %v880
    %v882 = vmul.f32 %v878, %v880
    %v883 = vld [vmem:[%s2 + $0x6] sm:$0x1]
    %v884 = vperm.slane %v883, 0
    %v885 = vadd.f32 %v881, %v884
    %v886 = vadd.f32 %v882, %v884
    %v887 = vld [vmem:[#allocation2 + $0x1c] sm:$0xf]
    %v888 = vld [vmem:[#allocation2 + $0x44] sm:$0xf]
    %v889 = vld [vmem:[#allocation2 + $0x6c] sm:$0xf]
    %v890 = vld [vmem:[#allocation2 + $0x94] sm:$0xf]
    %v891 = vld [vmem:[#allocation2 + $0xbc] sm:$0xf]
    %v892 = vld [vmem:[#allocation2 + $0xe4] sm:$0xf]
    %v893 = vld [vmem:[#allocation2 + $0x10c] sm:$0xf]
    %v894 = vld [vmem:[#allocation2 + $0x134] sm:$0xf]
    %v895 = vld [vmem:[#allocation2 + $0x15c] sm:$0xf]
    %v896 = vld [vmem:[#allocation2 + $0x184] sm:$0xf]
    %v897 = vld [vmem:[#allocation2 + $0x1ac] sm:$0xf]
    %v898 = vld [vmem:[#allocation2 + $0x1d4] sm:$0xf]
    %v899 = vld [vmem:[#allocation2 + $0x1fc] sm:$0xf]
    %v900 = vld [vmem:[#allocation2 + $0x224] sm:$0xf]
    %v901 = vld [vmem:[#allocation2 + $0x24c] sm:$0xf]
    %v902 = vld [vmem:[#allocation2 + $0x274] sm:$0xf]
    %v903 = vpack.c.bf16 %v886, %v885
    %v904 = vld [vmem:[%s2 + $0x9] sm:$0x1]
    %v905 = vperm.slane %v904, 0
    %v922 = vunpack.c.l.b16 %v887
    %v923 = vunpack.c.l.b16 %v888
    %v924 = vunpack.c.l.b16 %v889
    %v925 = vunpack.c.l.b16 %v890
    %v926 = vunpack.c.l.b16 %v891
    %v927 = vunpack.c.l.b16 %v892
    %v928 = vunpack.c.l.b16 %v893
    %v929 = vunpack.c.l.b16 %v894
    %v930 = vunpack.c.l.b16 %v895
    %v931 = vunpack.c.l.b16 %v896
    %v932 = vunpack.c.l.b16 %v897
    %v933 = vunpack.c.l.b16 %v898
    %v934 = vunpack.c.l.b16 %v899
    %v935 = vunpack.c.l.b16 %v900
    %v936 = vunpack.c.l.b16 %v901
    %v937 = vunpack.c.l.b16 %v902
    %v938 = vpack.c.b16 %v923, %v922
    %v939 = vpack.c.b16 %v925, %v924
    %v940 = vpack.c.b16 %v927, %v926
    %v941 = vpack.c.b16 %v929, %v928
    %v942 = vpack.c.b16 %v931, %v930
    %v943 = vpack.c.b16 %v933, %v932
    %v944 = vpack.c.b16 %v935, %v934
    %v945 = vpack.c.b16 %v937, %v936
    %954 = vmatpush.bf16.msra.mxu0 %v945
    %955 = vmatpush.bf16.msra.mxu0 %v944
    %956 = vmatpush.bf16.msra.mxu0 %v943
    %957 = vmatpush.bf16.msra.mxu0 %v942
    %958 = vmatpush.bf16.msra.mxu0 %v941
    %959 = vmatpush.bf16.msra.mxu0 %v940
    %960 = vmatpush.bf16.msra.mxu0 %v939
    %961 = vmatpush.bf16.msra.mxu0 %v938
    %962 = vmatmul.bf16.gmra.mxu0 %v903
    %v963 = vpop.f32.mrf.mxu0
    %v964 = vadd.f32 %v905, %v963
    %v965 = vpop.f32.mrf.mxu0
    %v966 = vadd.f32 %v905, %v965
    %967 = vdwg.mxu0
    %v968 = vld [vmem:[#allocation2 + $0x20] sm:$0xf]
    %v969 = vld [vmem:[#allocation2 + $0x48] sm:$0xf]
    %v970 = vld [vmem:[#allocation2 + $0x70] sm:$0xf]
    %v971 = vld [vmem:[#allocation2 + $0x98] sm:$0xf]
    %v972 = vld [vmem:[#allocation2 + $0xc0] sm:$0xf]
    %v973 = vld [vmem:[#allocation2 + $0xe8] sm:$0xf]
    %v974 = vld [vmem:[#allocation2 + $0x110] sm:$0xf]
    %v975 = vld [vmem:[#allocation2 + $0x138] sm:$0xf]
    %v976 = vld [vmem:[#allocation2 + $0x160] sm:$0xf]
    %v977 = vld [vmem:[#allocation2 + $0x188] sm:$0xf]
    %v978 = vld [vmem:[#allocation2 + $0x1b0] sm:$0xf]
    %v979 = vld [vmem:[#allocation2 + $0x1d8] sm:$0xf]
    %v980 = vld [vmem:[#allocation2 + $0x200] sm:$0xf]
    %v981 = vld [vmem:[#allocation2 + $0x228] sm:$0xf]
    %v982 = vld [vmem:[#allocation2 + $0x250] sm:$0xf]
    %v983 = vld [vmem:[#allocation2 + $0x278] sm:$0xf]
    %v984 = vpack.c.bf16 %v966, %v964
    %v985 = vld [vmem:[%s2 + $0xa] sm:$0x1]
    %v986 = vperm.slane %v985, 0
    %v1003 = vunpack.c.l.b16 %v968
    %v1004 = vunpack.c.l.b16 %v969
    %v1005 = vunpack.c.l.b16 %v970
    %v1006 = vunpack.c.l.b16 %v971
    %v1007 = vunpack.c.l.b16 %v972
    %v1008 = vunpack.c.l.b16 %v973
    %v1009 = vunpack.c.l.b16 %v974
    %v1010 = vunpack.c.l.b16 %v975
    %v1011 = vunpack.c.l.b16 %v976
    %v1012 = vunpack.c.l.b16 %v977
    %v1013 = vunpack.c.l.b16 %v978
    %v1014 = vunpack.c.l.b16 %v979
    %v1015 = vunpack.c.l.b16 %v980
    %v1016 = vunpack.c.l.b16 %v981
    %v1017 = vunpack.c.l.b16 %v982
    %v1018 = vunpack.c.l.b16 %v983
    %v1019 = vpack.c.b16 %v1004, %v1003
    %v1020 = vpack.c.b16 %v1006, %v1005
    %v1021 = vpack.c.b16 %v1008, %v1007
    %v1022 = vpack.c.b16 %v1010, %v1009
    %v1023 = vpack.c.b16 %v1012, %v1011
    %v1024 = vpack.c.b16 %v1014, %v1013
    %v1025 = vpack.c.b16 %v1016, %v1015
    %v1026 = vpack.c.b16 %v1018, %v1017
    %1035 = vmatpush.bf16.msra.mxu0 %v1026
    %1036 = vmatpush.bf16.msra.mxu0 %v1025
    %1037 = vmatpush.bf16.msra.mxu0 %v1024
    %1038 = vmatpush.bf16.msra.mxu0 %v1023
    %1039 = vmatpush.bf16.msra.mxu0 %v1022
    %1040 = vmatpush.bf16.msra.mxu0 %v1021
    %1041 = vmatpush.bf16.msra.mxu0 %v1020
    %1042 = vmatpush.bf16.msra.mxu0 %v1019
    %1043 = vmatmul.bf16.gmra.mxu0 %v984
    %v1044 = vpop.f32.mrf.mxu0
    %v1045 = vadd.f32 %v986, %v1044
    %v1046 = vpop.f32.mrf.mxu0
    %v1047 = vadd.f32 %v986, %v1046
    %1048 = vdwg.mxu0
    %v1049 = vld [vmem:[#allocation2 + $0x24] sm:$0xf]
    %v1050 = vld [vmem:[#allocation2 + $0x4c] sm:$0xf]
    %v1051 = vld [vmem:[#allocation2 + $0x74] sm:$0xf]
    %v1052 = vld [vmem:[#allocation2 + $0x9c] sm:$0xf]
    %v1053 = vld [vmem:[#allocation2 + $0xc4] sm:$0xf]
    %v1054 = vld [vmem:[#allocation2 + $0xec] sm:$0xf]
    %v1055 = vld [vmem:[#allocation2 + $0x114] sm:$0xf]
    %v1056 = vld [vmem:[#allocation2 + $0x13c] sm:$0xf]
    %v1057 = vld [vmem:[#allocation2 + $0x164] sm:$0xf]
    %v1058 = vld [vmem:[#allocation2 + $0x18c] sm:$0xf]
    %v1059 = vld [vmem:[#allocation2 + $0x1b4] sm:$0xf]
    %v1060 = vld [vmem:[#allocation2 + $0x1dc] sm:$0xf]
    %v1061 = vld [vmem:[#allocation2 + $0x204] sm:$0xf]
    %v1062 = vld [vmem:[#allocation2 + $0x22c] sm:$0xf]
    %v1063 = vld [vmem:[#allocation2 + $0x254] sm:$0xf]
    %v1064 = vld [vmem:[#allocation2 + $0x27c] sm:$0xf]
    %v1065 = vld [vmem:[%s2 + $0xb] sm:$0x1]
    %v1066 = vperm.slane %v1065, 0
    %v1083 = vunpack.c.l.b16 %v1049
    %v1084 = vunpack.c.l.b16 %v1050
    %v1085 = vunpack.c.l.b16 %v1051
    %v1086 = vunpack.c.l.b16 %v1052
    %v1087 = vunpack.c.l.b16 %v1053
    %v1088 = vunpack.c.l.b16 %v1054
    %v1089 = vunpack.c.l.b16 %v1055
    %v1090 = vunpack.c.l.b16 %v1056
    %v1091 = vunpack.c.l.b16 %v1057
    %v1092 = vunpack.c.l.b16 %v1058
    %v1093 = vunpack.c.l.b16 %v1059
    %v1094 = vunpack.c.l.b16 %v1060
    %v1095 = vunpack.c.l.b16 %v1061
    %v1096 = vunpack.c.l.b16 %v1062
    %v1097 = vunpack.c.l.b16 %v1063
    %v1098 = vunpack.c.l.b16 %v1064
    %v1099 = vpack.c.b16 %v1084, %v1083
    %v1100 = vpack.c.b16 %v1086, %v1085
    %v1101 = vpack.c.b16 %v1088, %v1087
    %v1102 = vpack.c.b16 %v1090, %v1089
    %v1103 = vpack.c.b16 %v1092, %v1091
    %v1104 = vpack.c.b16 %v1094, %v1093
    %v1105 = vpack.c.b16 %v1096, %v1095
    %v1106 = vpack.c.b16 %v1098, %v1097
    %1115 = vmatpush.bf16.msra.mxu0 %v1106
    %1116 = vmatpush.bf16.msra.mxu0 %v1105
    %1117 = vmatpush.bf16.msra.mxu0 %v1104
    %1118 = vmatpush.bf16.msra.mxu0 %v1103
    %1119 = vmatpush.bf16.msra.mxu0 %v1102
    %1120 = vmatpush.bf16.msra.mxu0 %v1101
    %1121 = vmatpush.bf16.msra.mxu0 %v1100
    %1122 = vmatpush.bf16.msra.mxu0 %v1099
    %1123 = vmatmul.bf16.gmra.mxu0 %v984
    %v1124 = vpop.f32.mrf.mxu0
    %v1125 = vadd.f32 %v1066, %v1124
    %v1126 = vpop.f32.mrf.mxu0
    %v1127 = vadd.f32 %v1066, %v1126
    %1128 = vdwg.mxu0
    %vm1129 = vcmp.lt.s32.totalorder %v59, 8
    %v1130 = vsel %vm1129, %v1045, -1e+30
    %v1131 = vsel %vm1129, %v1047, -1e+30
    %1132 = vmax.xlane.f32.xlu0 %v1130
    %v1133 = vpop.xlane.xlu0 %1132
    %1134 = vmax.xlane.f32.xlu0 %v1131
    %v1135 = vpop.xlane.xlu0 %1134
    %v1136 = vsub.f32 %v1130, %v1133
    %v1137 = vsub.f32 %v1131, %v1135
    %v1138 = vmul.f32 %v1136, 1.442695
    %v1139 = vpow.pop %v1138
    %v1140 = vmul.f32 %v1137, 1.442695
    %v1141 = vpow.pop %v1140
    %1142 = vadd.xlane.f32.xlu0 %v1139
    %v1143 = vpop.xlane.xlu0 %1142
    %1144 = vadd.xlane.f32.xlu0 %v1141
    %v1145 = vpop.xlane.xlu0 %1144
    %v1146 = vrcp.pop %v1143
    %v1147 = vrcp.pop %v1145
    %v1148 = vmul.f32 %v1139, %v1146
    %v1149 = vmul.f32 %v1141, %v1147
    %v1150 = vadd.s32 %v452, 8
    %v1151 = vadd.s32 %v452, 16
    %v1152 = vadd.s32 %v452, 24
    %v1153 = vadd.s32 %v452, 32
    %v1154 = vadd.s32 %v452, 40
    %v1155 = vadd.s32 %v452, 48
    %v1156 = vadd.s32 %v452, 56
    %v1157 = vadd.s32 %v452, 64
    %v1158 = vadd.s32 %v452, 72
    %v1159 = vadd.s32 %v452, 80
    %v1160 = vadd.s32 %v452, 88
    %v1161 = vadd.s32 %v452, 96
    %v1162 = vadd.s32 %v452, 104
    %v1163 = vadd.s32 %v452, 112
    %v1164 = vadd.s32 %v452, 120
    %vm1165 = vcmp.le.s32.totalorder %v452, %v59
    %vm1166 = vcmp.le.s32.totalorder %v1150, %v59
    %vm1167 = vcmp.le.s32.totalorder %v1151, %v59
    %vm1168 = vcmp.le.s32.totalorder %v1152, %v59
    %vm1169 = vcmp.le.s32.totalorder %v1153, %v59
    %vm1170 = vcmp.le.s32.totalorder %v1154, %v59
    %vm1171 = vcmp.le.s32.totalorder %v1155, %v59
    %vm1172 = vcmp.le.s32.totalorder %v1156, %v59
    %vm1173 = vcmp.le.s32.totalorder %v1157, %v59
    %vm1174 = vcmp.le.s32.totalorder %v1158, %v59
    %vm1175 = vcmp.le.s32.totalorder %v1159, %v59
    %vm1176 = vcmp.le.s32.totalorder %v1160, %v59
    %vm1177 = vcmp.le.s32.totalorder %v1161, %v59
    %vm1178 = vcmp.le.s32.totalorder %v1162, %v59
    %vm1179 = vcmp.le.s32.totalorder %v1163, %v59
    %vm1180 = vcmp.le.s32.totalorder %v1164, %v59
    %v1181 = vsel %vm1165, 1, 0
    %v1182 = vsel %vm1166, 1, 0
    %v1183 = vsel %vm1167, 1, 0
    %v1184 = vsel %vm1168, 1, 0
    %v1185 = vsel %vm1169, 1, 0
    %v1186 = vsel %vm1170, 1, 0
    %v1187 = vsel %vm1171, 1, 0
    %v1188 = vsel %vm1172, 1, 0
    %v1189 = vsel %vm1173, 1, 0
    %v1190 = vsel %vm1174, 1, 0
    %v1191 = vsel %vm1175, 1, 0
    %v1192 = vsel %vm1176, 1, 0
    %v1193 = vsel %vm1177, 1, 0
    %v1194 = vsel %vm1178, 1, 0
    %v1195 = vsel %vm1179, 1, 0
    %v1196 = vsel %vm1180, 1, 0
    %v1197 = vcvt.s32.f32 %v1181
    %v1198 = vcvt.s32.f32 %v1182
    %v1199 = vcvt.s32.f32 %v1183
    %v1200 = vcvt.s32.f32 %v1184
    %v1201 = vcvt.s32.f32 %v1185
    %v1202 = vcvt.s32.f32 %v1186
    %v1203 = vcvt.s32.f32 %v1187
    %v1204 = vcvt.s32.f32 %v1188
    %v1205 = vcvt.s32.f32 %v1189
    %v1206 = vcvt.s32.f32 %v1190
    %v1207 = vcvt.s32.f32 %v1191
    %v1208 = vcvt.s32.f32 %v1192
    %v1209 = vcvt.s32.f32 %v1193
    %v1210 = vcvt.s32.f32 %v1194
    %v1211 = vcvt.s32.f32 %v1195
    %v1212 = vcvt.s32.f32 %v1196
    %1213 = vmatpush.msra.mxu0 %v1212
    %1214 = vmatpush.msra.mxu0 %v1211
    %1215 = vmatpush.msra.mxu0 %v1210
    %1216 = vmatpush.msra.mxu0 %v1209
    %1217 = vmatpush.msra.mxu0 %v1208
    %1218 = vmatpush.msra.mxu0 %v1207
    %1219 = vmatpush.msra.mxu0 %v1206
    %1220 = vmatpush.msra.mxu0 %v1205
    %1221 = vmatpush.msra.mxu0 %v1204
    %1222 = vmatpush.msra.mxu0 %v1203
    %1223 = vmatpush.msra.mxu0 %v1202
    %1224 = vmatpush.msra.mxu0 %v1201
    %1225 = vmatpush.msra.mxu0 %v1200
    %1226 = vmatpush.msra.mxu0 %v1199
    %1227 = vmatpush.msra.mxu0 %v1198
    %1228 = vmatpush.msra.mxu0 %v1197
    %1229 = vmatmul.f32.gmra.mxu0 %v1148
    %v1230 = vpop.f32.mrf.mxu0
    %v1231 = vadd.f32 0.0, %v1230
    %1232 = vmatmul.f32.gmra.mxu0 %v1149
    %v1233 = vpop.f32.mrf.mxu0
    %v1234 = vadd.f32 0.0, %v1233
    %1235 = vdwg.mxu0
    %1237 = vset.pattern.permute.xlu0 0
    %1238 = vperm.xlu0 %1237, %v83
    %v1239 = vpop.permute.xlu0 %1238
    %1242 = vset.pattern.permute.xlu0 0
    %1243 = vperm.xlu0 %1242, %v84
    %v1244 = vpop.permute.xlu0 %1243
    %vm1246 = vcmp.lt.f32.partialorder %v1231, %v1239
    %vm1247 = vcmp.lt.f32.partialorder %v1234, %v1244
    %v1248 = vsel %vm1246, 1, 0
    %v1249 = vsel %vm1247, 1, 0
    %v1250 = vand.u32 %v1248, 65535
    %v1251 = vshrl.u32 %v1248, 16
    %v1252 = vcvt.s32.f32 %v1250
    %v1253 = vcvt.s32.f32 %v1251
    %1254 = vadd.xlane.f32.xlu0 %v1252
    %v1255 = vpop.xlane.xlu0 %1254
    %1256 = vadd.xlane.f32.xlu0 %v1253
    %v1257 = vpop.xlane.xlu0 %1256
    %v1258 = vcvt.f32.s32 %v1255
    %v1259 = vcvt.f32.s32 %v1257
    %v1260 = vshll.u32 %v1259, 16
    %v1261 = vadd.s32 %v1260, %v1258
    %v1262 = vand.u32 %v1249, 65535
    %v1263 = vshrl.u32 %v1249, 16
    %v1264 = vcvt.s32.f32 %v1262
    %v1265 = vcvt.s32.f32 %v1263
    %1266 = vadd.xlane.f32.xlu0 %v1264
    %v1267 = vpop.xlane.xlu0 %1266
    %1268 = vadd.xlane.f32.xlu0 %v1265
    %v1269 = vpop.xlane.xlu0 %1268
    %v1270 = vcvt.f32.s32 %v1267
    %v1271 = vcvt.f32.s32 %v1269
    %v1272 = vshll.u32 %v1271, 16
    %v1273 = vadd.s32 %v1272, %v1270
    %vm1274 = vcmp.lt.s32.totalorder %v1261, 7
    %v1275 = vsel %vm1274, %v1261, 7
    %vm1276 = vcmp.lt.s32.totalorder %v1273, 7
    %v1277 = vsel %vm1276, %v1273, 7
    %v1278 = vcvt.s32.f32 %v452
    %v1279 = vcvt.s32.f32 %v1150
    %v1280 = vcvt.s32.f32 %v1151
    %v1281 = vcvt.s32.f32 %v1152
    %v1282 = vcvt.s32.f32 %v1153
    %v1283 = vcvt.s32.f32 %v1154
    %v1284 = vcvt.s32.f32 %v1155
    %v1285 = vcvt.s32.f32 %v1156
    %v1286 = vcvt.s32.f32 %v1157
    %v1287 = vcvt.s32.f32 %v1158
    %v1288 = vcvt.s32.f32 %v1159
    %v1289 = vcvt.s32.f32 %v1160
    %v1290 = vcvt.s32.f32 %v1161
    %v1291 = vcvt.s32.f32 %v1162
    %v1292 = vcvt.s32.f32 %v1163
    %v1293 = vcvt.s32.f32 %v1164
    %v1294 = vcvt.s32.f32 %v59
    %v1295 = vrcp.pop 4.0
    %v1296 = vmul.f32 4.0, %v1295
    %v1297 = vsub.f32 1.0, %v1296
    %v1298 = vmul.f32 %v1295, %v1297
    %v1299 = vadd.f32 %v1295, %v1298
    %vm1300 = vweird.f32 %v1295
    %v1301 = vsel %vm1300, %v1295, %v1299
    %v1302 = vmul.f32 %v1278, %v1301
    %v1303 = vmul.f32 %v1279, %v1301
    %v1304 = vmul.f32 %v1280, %v1301
    %v1305 = vmul.f32 %v1281, %v1301
    %v1306 = vmul.f32 %v1282, %v1301
    %v1307 = vmul.f32 %v1283, %v1301
    %v1308 = vmul.f32 %v1284, %v1301
    %v1309 = vmul.f32 %v1285, %v1301
    %v1310 = vmul.f32 %v1286, %v1301
    %v1311 = vmul.f32 %v1287, %v1301
    %v1312 = vmul.f32 %v1288, %v1301
    %v1313 = vmul.f32 %v1289, %v1301
    %v1314 = vmul.f32 %v1290, %v1301
    %v1315 = vmul.f32 %v1291, %v1301
    %v1316 = vmul.f32 %v1292, %v1301
    %v1317 = vmul.f32 %v1293, %v1301
    %v1318 = vfloor.f32 %v1302
    %v1319 = vfloor.f32 %v1303
    %v1320 = vfloor.f32 %v1304
    %v1321 = vfloor.f32 %v1305
    %v1322 = vfloor.f32 %v1306
    %v1323 = vfloor.f32 %v1307
    %v1324 = vfloor.f32 %v1308
    %v1325 = vfloor.f32 %v1309
    %v1326 = vfloor.f32 %v1310
    %v1327 = vfloor.f32 %v1311
    %v1328 = vfloor.f32 %v1312
    %v1329 = vfloor.f32 %v1313
    %v1330 = vfloor.f32 %v1314
    %v1331 = vfloor.f32 %v1315
    %v1332 = vfloor.f32 %v1316
    %v1333 = vfloor.f32 %v1317
    %v1334 = vmul.f32 %v1318, 4.0
    %v1335 = vmul.f32 %v1319, 4.0
    %v1336 = vmul.f32 %v1320, 4.0
    %v1337 = vmul.f32 %v1321, 4.0
    %v1338 = vmul.f32 %v1322, 4.0
    %v1339 = vmul.f32 %v1323, 4.0
    %v1340 = vmul.f32 %v1324, 4.0
    %v1341 = vmul.f32 %v1325, 4.0
    %v1342 = vmul.f32 %v1326, 4.0
    %v1343 = vmul.f32 %v1327, 4.0
    %v1344 = vmul.f32 %v1328, 4.0
    %v1345 = vmul.f32 %v1329, 4.0
    %v1346 = vmul.f32 %v1330, 4.0
    %v1347 = vmul.f32 %v1331, 4.0
    %v1348 = vmul.f32 %v1332, 4.0
    %v1349 = vmul.f32 %v1333, 4.0
    %v1350 = vsub.f32 %v1278, %v1334
    %v1351 = vsub.f32 %v1279, %v1335
    %v1352 = vsub.f32 %v1280, %v1336
    %v1353 = vsub.f32 %v1281, %v1337
    %v1354 = vsub.f32 %v1282, %v1338
    %v1355 = vsub.f32 %v1283, %v1339
    %v1356 = vsub.f32 %v1284, %v1340
    %v1357 = vsub.f32 %v1285, %v1341
    %v1358 = vsub.f32 %v1286, %v1342
    %v1359 = vsub.f32 %v1287, %v1343
    %v1360 = vsub.f32 %v1288, %v1344
    %v1361 = vsub.f32 %v1289, %v1345
    %v1362 = vsub.f32 %v1290, %v1346
    %v1363 = vsub.f32 %v1291, %v1347
    %v1364 = vsub.f32 %v1292, %v1348
    %v1365 = vsub.f32 %v1293, %v1349
    %vm1366 = vcmp.eq.f32.partialorder %v1350, %v1294
    %vm1367 = vcmp.eq.f32.partialorder %v1351, %v1294
    %vm1368 = vcmp.eq.f32.partialorder %v1352, %v1294
    %vm1369 = vcmp.eq.f32.partialorder %v1353, %v1294
    %vm1370 = vcmp.eq.f32.partialorder %v1354, %v1294
    %vm1371 = vcmp.eq.f32.partialorder %v1355, %v1294
    %vm1372 = vcmp.eq.f32.partialorder %v1356, %v1294
    %vm1373 = vcmp.eq.f32.partialorder %v1357, %v1294
    %vm1374 = vcmp.eq.f32.partialorder %v1358, %v1294
    %vm1375 = vcmp.eq.f32.partialorder %v1359, %v1294
    %vm1376 = vcmp.eq.f32.partialorder %v1360, %v1294
    %vm1377 = vcmp.eq.f32.partialorder %v1361, %v1294
    %vm1378 = vcmp.eq.f32.partialorder %v1362, %v1294
    %vm1379 = vcmp.eq.f32.partialorder %v1363, %v1294
    %vm1380 = vcmp.eq.f32.partialorder %v1364, %v1294
    %vm1381 = vcmp.eq.f32.partialorder %v1365, %v1294
    %v1382 = vsel %vm1366, 1, 0
    %v1383 = vsel %vm1367, 1, 0
    %v1384 = vsel %vm1368, 1, 0
    %v1385 = vsel %vm1369, 1, 0
    %v1386 = vsel %vm1370, 1, 0
    %v1387 = vsel %vm1371, 1, 0
    %v1388 = vsel %vm1372, 1, 0
    %v1389 = vsel %vm1373, 1, 0
    %v1390 = vsel %vm1374, 1, 0
    %v1391 = vsel %vm1375, 1, 0
    %v1392 = vsel %vm1376, 1, 0
    %v1393 = vsel %vm1377, 1, 0
    %v1394 = vsel %vm1378, 1, 0
    %v1395 = vsel %vm1379, 1, 0
    %v1396 = vsel %vm1380, 1, 0
    %v1397 = vsel %vm1381, 1, 0
    %v1398 = vcvt.s32.f32 %v1382
    %v1399 = vcvt.s32.f32 %v1383
    %v1400 = vcvt.s32.f32 %v1384
    %v1401 = vcvt.s32.f32 %v1385
    %v1402 = vcvt.s32.f32 %v1386
    %v1403 = vcvt.s32.f32 %v1387
    %v1404 = vcvt.s32.f32 %v1388
    %v1405 = vcvt.s32.f32 %v1389
    %v1406 = vcvt.s32.f32 %v1390
    %v1407 = vcvt.s32.f32 %v1391
    %v1408 = vcvt.s32.f32 %v1392
    %v1409 = vcvt.s32.f32 %v1393
    %v1410 = vcvt.s32.f32 %v1394
    %v1411 = vcvt.s32.f32 %v1395
    %v1412 = vcvt.s32.f32 %v1396
    %v1413 = vcvt.s32.f32 %v1397
    %vm1414 = vcmp.eq.s32.totalorder %v59, %v1275
    %vm1415 = vcmp.eq.s32.totalorder %v59, %v1277
    %v1416 = vsel %vm1414, 1, 0
    %v1417 = vsel %vm1415, 1, 0
    %v1418 = vcvt.s32.f32 %v1416
    %v1419 = vcvt.s32.f32 %v1417
    %v1420 = vmul.u32 %v1275, 4
    %v1421 = vmul.u32 %v1277, 4
    %vm1422 = vcmp.ge.s32.totalorder %v59, %v1420
    %vm1423 = vcmp.ge.s32.totalorder %v59, %v1421
    %v1424 = vadd.s32 %v1420, 4
    %v1425 = vadd.s32 %v1421, 4
    %vm1426 = vcmp.lt.s32.totalorder %v59, %v1424
    %vm1427 = vcmp.lt.s32.totalorder %v59, %v1425
    %vm1428 = vmand %vm1422, %vm1426
    %vm1429 = vmand %vm1423, %vm1427
    %v1430 = vsel %vm1428, 1, 0
    %v1431 = vsel %vm1429, 1, 0
    %v1432 = vcvt.s32.f32 %v1430
    %v1433 = vcvt.s32.f32 %v1431
    %v1434 = vmul.f32 %v1125, %v1432
    %v1435 = vmul.f32 %v1127, %v1433
    %1436 = vmatpush.msra.mxu0 %v1413
    %1437 = vmatpush.msra.mxu0 %v1412
    %1438 = vmatpush.msra.mxu0 %v1411
    %1439 = vmatpush.msra.mxu0 %v1410
    %1440 = vmatpush.msra.mxu0 %v1409
    %1441 = vmatpush.msra.mxu0 %v1408
    %1442 = vmatpush.msra.mxu0 %v1407
    %1443 = vmatpush.msra.mxu0 %v1406
    %1444 = vmatpush.msra.mxu0 %v1405
    %1445 = vmatpush.msra.mxu0 %v1404
    %1446 = vmatpush.msra.mxu0 %v1403
    %1447 = vmatpush.msra.mxu0 %v1402
    %1448 = vmatpush.msra.mxu0 %v1401
    %1449 = vmatpush.msra.mxu0 %v1400
    %1450 = vmatpush.msra.mxu0 %v1399
    %1451 = vmatpush.msra.mxu0 %v1398
    %1452 = vmatmul.f32.gmra.mxu0 %v1434
    %v1453 = vpop.f32.mrf.mxu0
    %v1454 = vadd.f32 0.0, %v1453
    %1455 = vmatmul.f32.gmra.mxu0 %v1435
    %v1456 = vpop.f32.mrf.mxu0
    %v1457 = vadd.f32 0.0, %v1456
    %1458 = vdwg.mxu0
    %1459 = vmatpush.msra.mxu0 %v80
    %1460 = vmatpush.msra.mxu0 %v79
    %1461 = vmatpush.msra.mxu0 %v78
    %1462 = vmatpush.msra.mxu0 %v77
    %1463 = vmatpush.msra.mxu0 %v76
    %1464 = vmatpush.msra.mxu0 %v75
    %1465 = vmatpush.msra.mxu0 %v74
    %1466 = vmatpush.msra.mxu0 %v73
    %1467 = vmatpush.msra.mxu0 %v72
    %1468 = vmatpush.msra.mxu0 %v71
    %1469 = vmatpush.msra.mxu0 %v70
    %1470 = vmatpush.msra.mxu0 %v69
    %1471 = vmatpush.msra.mxu0 %v68
    %1472 = vmatpush.msra.mxu0 %v67
    %1473 = vmatpush.msra.mxu0 %v66
    %1474 = vmatpush.msra.mxu0 %v65
    %1475 = vmatmul.f32.gmra.mxu0 %v1418
    %v1476 = vpop.f32.mrf.mxu0
    %v1477 = vadd.f32 %v1454, %v1476
    %1478 = vmatmul.f32.gmra.mxu0 %v1419
    %v1479 = vpop.f32.mrf.mxu0
    %v1480 = vadd.f32 %v1457, %v1479
    %1481 = vdwg.mxu0
    %1482 = vst [vmem:[%s6] sm:$0xff] %v1477
    %1483 = vst [vmem:[%s6 + $0x8] sm:$0xff] %v1480
    %1484 = vmatpush.xpose.msra.mxu0 %v80
    %1485 = vmatpush.xpose.msra.mxu0 %v79
    %1486 = vmatpush.xpose.msra.mxu0 %v78
    %1487 = vmatpush.xpose.msra.mxu0 %v77
    %1488 = vmatpush.xpose.msra.mxu0 %v76
    %1489 = vmatpush.xpose.msra.mxu0 %v75
    %1490 = vmatpush.xpose.msra.mxu0 %v74
    %1491 = vmatpush.xpose.msra.mxu0 %v73
    %1492 = vmatpush.xpose.msra.mxu0 %v72
    %1493 = vmatpush.xpose.msra.mxu0 %v71
    %1494 = vmatpush.xpose.msra.mxu0 %v70
    %1495 = vmatpush.xpose.msra.mxu0 %v69
    %1496 = vmatpush.xpose.msra.mxu0 %v68
    %1497 = vmatpush.xpose.msra.mxu0 %v67
    %1498 = vmatpush.xpose.msra.mxu0 %v66
    %1499 = vmatpush.xpose.msra.mxu0 %v65
    %1500 = vmatmul.f32.gmra.mxu0 %v81
    %v1501 = vpop.f32.mrf.mxu0
    %v1502 = vadd.f32 0.0, %v1501
    %1503 = vmatmul.f32.gmra.mxu0 %v82
    %v1504 = vpop.f32.mrf.mxu0
    %v1505 = vadd.f32 0.0, %v1504
    %1506 = vdwg.mxu0
    %v1507 = vmul.f32 %v65, %v65
    %v1508 = vmul.f32 %v66, %v66
    %v1509 = vmul.f32 %v67, %v67
    %v1510 = vmul.f32 %v68, %v68
    %v1511 = vmul.f32 %v69, %v69
    %v1512 = vmul.f32 %v70, %v70
    %v1513 = vmul.f32 %v71, %v71
    %v1514 = vmul.f32 %v72, %v72
    %v1515 = vmul.f32 %v73, %v73
    %v1516 = vmul.f32 %v74, %v74
    %v1517 = vmul.f32 %v75, %v75
    %v1518 = vmul.f32 %v76, %v76
    %v1519 = vmul.f32 %v77, %v77
    %v1520 = vmul.f32 %v78, %v78
    %v1521 = vmul.f32 %v79, %v79
    %v1522 = vmul.f32 %v80, %v80
    %1523 = vmatpush.xpose.msra.mxu0 %v1522
    %1524 = vmatpush.xpose.msra.mxu0 %v1521
    %1525 = vmatpush.xpose.msra.mxu0 %v1520
    %1526 = vmatpush.xpose.msra.mxu0 %v1519
    %1527 = vmatpush.xpose.msra.mxu0 %v1518
    %1528 = vmatpush.xpose.msra.mxu0 %v1517
    %1529 = vmatpush.xpose.msra.mxu0 %v1516
    %1530 = vmatpush.xpose.msra.mxu0 %v1515
    %1531 = vmatpush.xpose.msra.mxu0 %v1514
    %1532 = vmatpush.xpose.msra.mxu0 %v1513
    %1533 = vmatpush.xpose.msra.mxu0 %v1512
    %1534 = vmatpush.xpose.msra.mxu0 %v1511
    %1535 = vmatpush.xpose.msra.mxu0 %v1510
    %1536 = vmatpush.xpose.msra.mxu0 %v1509
    %1537 = vmatpush.xpose.msra.mxu0 %v1508
    %1538 = vmatpush.xpose.msra.mxu0 %v1507
    %1539 = vmatmul.f32.gmra.mxu0 1.0
    %v1540 = vpop.f32.mrf.mxu0
    %v1541 = vadd.f32 0.0, %v1540
    %1542 = vdwg.mxu0
    %v1543 = vmul.f32 %v1502, 2.0
    %v1544 = vmul.f32 %v1505, 2.0
    %v1545 = vperm.slane %v1541, 0
    %v1546 = vsub.f32 %v1545, %v1543
    %v1547 = vsub.f32 %v1545, %v1544
    %v1548 = vsel %vm1129, 1, 0
    %vm1549 = vcmp.eq.s32.totalorder %v1548, 1
    %v1550 = vsel %vm1549, %v1546, 1e+30
    %v1551 = vsel %vm1549, %v1547, 1e+30
    %1552 = vmin.xlane.f32.xlu0 %v1550
    %v1553 = vpop.xlane.xlu0 %1552
    %1554 = vmin.xlane.f32.xlu0 %v1551
    %v1555 = vpop.xlane.xlu0 %1554
    %vm1556 = vcmp.le.f32.partialorder %v1550, %v1553
    %vm1557 = vcmp.le.f32.partialorder %v1551, %v1555
    %v1558 = vsel %vm1556, %v59, 128
    %v1559 = vsel %vm1557, %v59, 128
    %v1560 = vand.u32 %v1558, 65535
    %v1561 = vshra.s32 %v1558, 16
    %v1562 = vcvt.s32.f32 %v1560
    %v1563 = vcvt.s32.f32 %v1561
    %1564 = vmin.xlane.f32.xlu0 %v1563
    %v1565 = vpop.xlane.xlu0 %1564
    %vm1566 = vcmp.eq.f32.partialorder %v1563, %v1565
    %v1567 = vsel %vm1566, %v1562, inf
    %1568 = vmin.xlane.f32.xlu0 %v1567
    %v1569 = vpop.xlane.xlu0 %1568
    %v1570 = vcvt.f32.s32 %v1569
    %v1571 = vcvt.f32.s32 %v1565
    %v1572 = vshll.u32 %v1571, 16
    %v1573 = vadd.s32 %v1572, %v1570
    %v1574 = vand.u32 %v1559, 65535
    %v1575 = vshra.s32 %v1559, 16
    %v1576 = vcvt.s32.f32 %v1574
    %v1577 = vcvt.s32.f32 %v1575
    %1578 = vmin.xlane.f32.xlu0 %v1577
    %v1579 = vpop.xlane.xlu0 %1578
    %vm1580 = vcmp.eq.f32.partialorder %v1577, %v1579
    %v1581 = vsel %vm1580, %v1576, inf
    %1582 = vmin.xlane.f32.xlu0 %v1581
    %v1583 = vpop.xlane.xlu0 %1582
    %v1584 = vcvt.f32.s32 %v1583
    %v1585 = vcvt.f32.s32 %v1579
    %v1586 = vshll.u32 %v1585, 16
    %v1587 = vadd.s32 %v1586, %v1584
    %vm1588 = vcmp.eq.s32.totalorder %v59, %v1573
    %vm1589 = vcmp.eq.s32.totalorder %v59, %v1587
    %v1590 = vsel %vm1588, 1, 0
    %v1591 = vsel %vm1589, 1, 0
    %v1592 = vcvt.s32.f32 %v1590
    %v1593 = vcvt.s32.f32 %v1591
    %v1594 = vmul.u32 %v1573, 4
    %v1595 = vmul.u32 %v1587, 4
    %vm1596 = vcmp.ge.s32.totalorder %v59, %v1594
    %vm1597 = vcmp.ge.s32.totalorder %v59, %v1595
    %v1598 = vadd.s32 %v1594, 4
    %v1599 = vadd.s32 %v1595, 4
    %vm1600 = vcmp.lt.s32.totalorder %v59, %v1598
    %vm1601 = vcmp.lt.s32.totalorder %v59, %v1599
    %vm1602 = vmand %vm1596, %vm1600
    %vm1603 = vmand %vm1597, %vm1601
    %v1604 = vsel %vm1602, 1, 0
    %v1605 = vsel %vm1603, 1, 0
    %v1606 = vcvt.s32.f32 %v1604
    %v1607 = vcvt.s32.f32 %v1605
    %1608 = vmatpush.msra.mxu0 %v80
    %1609 = vmatpush.msra.mxu0 %v79
    %1610 = vmatpush.msra.mxu0 %v78
    %1611 = vmatpush.msra.mxu0 %v77
    %1612 = vmatpush.msra.mxu0 %v76
    %1613 = vmatpush.msra.mxu0 %v75
    %1614 = vmatpush.msra.mxu0 %v74
    %1615 = vmatpush.msra.mxu0 %v73
    %1616 = vmatpush.msra.mxu0 %v72
    %1617 = vmatpush.msra.mxu0 %v71
    %1618 = vmatpush.msra.mxu0 %v70
    %1619 = vmatpush.msra.mxu0 %v69
    %1620 = vmatpush.msra.mxu0 %v68
    %1621 = vmatpush.msra.mxu0 %v67
    %1622 = vmatpush.msra.mxu0 %v66
    %1623 = vmatpush.msra.mxu0 %v65
    %1624 = vmatmul.f32.gmra.mxu0 %v1592
    %v1625 = vpop.f32.mrf.mxu0
    %v1626 = vadd.f32 0.0, %v1625
    %1627 = vmatmul.f32.gmra.mxu0 %v1593
    %v1628 = vpop.f32.mrf.mxu0
    %v1629 = vadd.f32 0.0, %v1628
    %1630 = vdwg.mxu0
    %v1631 = vsub.f32 %v81, %v1626
    %v1632 = vsub.f32 %v82, %v1629
    %v1633 = vmul.f32 %v1125, %v1606
    %v1634 = vmul.f32 %v1127, %v1607
    %1635 = vmatpush.msra.mxu0 %v1413
    %1636 = vmatpush.msra.mxu0 %v1412
    %1637 = vmatpush.msra.mxu0 %v1411
    %1638 = vmatpush.msra.mxu0 %v1410
    %1639 = vmatpush.msra.mxu0 %v1409
    %1640 = vmatpush.msra.mxu0 %v1408
    %1641 = vmatpush.msra.mxu0 %v1407
    %1642 = vmatpush.msra.mxu0 %v1406
    %1643 = vmatpush.msra.mxu0 %v1405
    %1644 = vmatpush.msra.mxu0 %v1404
    %1645 = vmatpush.msra.mxu0 %v1403
    %1646 = vmatpush.msra.mxu0 %v1402
    %1647 = vmatpush.msra.mxu0 %v1401
    %1648 = vmatpush.msra.mxu0 %v1400
    %1649 = vmatpush.msra.mxu0 %v1399
    %1650 = vmatpush.msra.mxu0 %v1398
    %1651 = vmatmul.f32.gmra.mxu0 %v1633
    %v1652 = vpop.f32.mrf.mxu0
    %v1653 = vadd.f32 0.0, %v1652
    %1654 = vmatmul.f32.gmra.mxu0 %v1634
    %v1655 = vpop.f32.mrf.mxu0
    %v1656 = vadd.f32 0.0, %v1655
    %1657 = vdwg.mxu0
    %v1658 = vsub.f32 %v1653, %v1631
    %v1659 = vsub.f32 %v1656, %v1632
    %v1660 = vmul.f32 %v1658, %v1658
    %v1661 = vmul.f32 %v1659, %v1659
    %v1662 = vlog2.pop %v1143
    %v1663 = vmul.f32 %v1662, 0.6931472
    %v1664 = vlog2.pop %v1145
    %v1665 = vmul.f32 %v1664, 0.6931472
    %v1666 = vsub.f32 %v1136, %v1663
    %v1667 = vsub.f32 %v1137, %v1665
    %v1668 = vmul.f32 %v1592, %v1666
    %v1669 = vmul.f32 %v1593, %v1667
    %1670 = vadd.xlane.f32.xlu0 %v1668
    %v1671 = vpop.xlane.xlu0 %1670
    %1672 = vadd.xlane.f32.xlu0 %v1669
    %v1673 = vpop.xlane.xlu0 %1672
    %v1674 = vmul.f32 %v1671, 1.442695
    %v1675 = vpow.pop %v1674
    %v1676 = vmul.f32 %v1673, 1.442695
    %v1677 = vpow.pop %v1676
    %v1678 = vmin.f32 %v1675, 1.0
    %v1679 = vmin.f32 %v1677, 1.0
    %v1680 = vsub.f32 1.0, %v1678
    %v1681 = vsub.f32 1.0, %v1679
    %v1682 = vmul.f32 %v1680, %v1680
    %v1683 = vmul.f32 %v1681, %v1681
    %v1684 = vsub.f32 0.0, %v1682
    %v1685 = vsub.f32 0.0, %v1683
    %v1686 = vmul.f32 %v1684, %v1671
    %v1687 = vmul.f32 %v1685, %v1673
    %v1688 = vsub.f32 1.0, %v83
    %v1689 = vsub.f32 1.0, %v84
    %v1690 = vmul.f32 %v1686, %v1688
    %v1691 = vmul.f32 %v1687, %v1689
    %1693 = vset.pattern.permute.xlu0 1
    %1694 = vperm.xlu0 %1693, %v1688
    %v1695 = vpop.permute.xlu0 %1694
    %1698 = vset.pattern.permute.xlu0 1
    %1699 = vperm.xlu0 %1698, %v1689
    %v1700 = vpop.permute.xlu0 %1699
    %v1702 = vmul.f32 %v1660, %v1695
    %v1703 = vmul.f32 %v1661, %v1700
    %v1704 = vsub.f32 %v1477, %v81
    %v1705 = vsub.f32 %v1480, %v82
    %v1706 = vmul.f32 %v1704, %v1704
    %v1707 = vmul.f32 %v1705, %v1705
    %v1708 = vand.u32 2147483647, %v1704
    %v1709 = vand.u32 2147483647, %v1705
    %v1710 = vmul.f32 %v81, %v81
    %v1711 = vmul.f32 %v82, %v82
    %1712 = vadd.xlane.f32.xlu0 %v1710
    %v1713 = vpop.xlane.xlu0 %1712
    %1714 = vadd.xlane.f32.xlu0 %v1711
    %v1715 = vpop.xlane.xlu0 %1714
    %v1716 = vrsqrt.pop %v1713
    %v1717 = vmul.f32 %v1716, %v1713
    %v1718 = vmul.f32 %v1717, %v1716
    %v1719 = vmul.f32 0.5, %v1718
    %v1720 = vsub.f32 1.5, %v1719
    %v1721 = vmul.f32 %v1716, %v1720
    %v1722 = vmul.f32 %v1713, %v1721
    %vm1723 = vcmp.eq.f32.partialorder %v1713, inf
    %v1724 = vsel %vm1723, %v1713, %v1722
    %vm1725 = vcmp.eq.f32.partialorder %v1713, 0.0
    %v1726 = vand.u32 %v1713, 2147483648
    %v1727 = vsel %vm1725, %v1726, %v1724
    %v1728 = vrsqrt.pop %v1715
    %v1729 = vmul.f32 %v1728, %v1715
    %v1730 = vmul.f32 %v1729, %v1728
    %v1731 = vmul.f32 0.5, %v1730
    %v1732 = vsub.f32 1.5, %v1731
    %v1733 = vmul.f32 %v1728, %v1732
    %v1734 = vmul.f32 %v1715, %v1733
    %vm1735 = vcmp.eq.f32.partialorder %v1715, inf
    %v1736 = vsel %vm1735, %v1715, %v1734
    %vm1737 = vcmp.eq.f32.partialorder %v1715, 0.0
    %v1738 = vand.u32 %v1715, 2147483648
    %v1739 = vsel %vm1737, %v1738, %v1736
    %v1740 = vadd.f32 %v1727, 1e-09
    %v1741 = vadd.f32 %v1739, 1e-09
    %v1742 = vrcp.pop %v1740
    %v1743 = vmul.f32 %v1740, %v1742
    %v1744 = vsub.f32 1.0, %v1743
    %v1745 = vmul.f32 %v1742, %v1744
    %v1746 = vadd.f32 %v1742, %v1745
    %vm1747 = vweird.f32 %v1740
    %vm1748 = vweird.f32 %v1742
    %vm1749 = vmor %vm1747, %vm1748
    %v1750 = vsel %vm1749, %v1742, %v1746
    %v1751 = vand.u32 2147483647, %v1740
    %vm1752 = vcmp.eq.f32.partialorder %v1751, 8.507059e+37
    %v1753 = vand.u32 %v1740, 2147483648
    %v1754 = vor.u32 1.1754944e-38, %v1753
    %v1755 = vsel %vm1752, %v1754, %v1750
    %v1756 = vmul.f32 %v1706, %v1755
    %v1757 = vrcp.pop %v1741
    %v1758 = vmul.f32 %v1741, %v1757
    %v1759 = vsub.f32 1.0, %v1758
    %v1760 = vmul.f32 %v1757, %v1759
    %v1761 = vadd.f32 %v1757, %v1760
    %vm1762 = vweird.f32 %v1741
    %vm1763 = vweird.f32 %v1757
    %vm1764 = vmor %vm1762, %vm1763
    %v1765 = vsel %vm1764, %v1757, %v1761
    %v1766 = vand.u32 2147483647, %v1741
    %vm1767 = vcmp.eq.f32.partialorder %v1766, 8.507059e+37
    %v1768 = vand.u32 %v1741, 2147483648
    %v1769 = vor.u32 1.1754944e-38, %v1768
    %v1770 = vsel %vm1767, %v1769, %v1765
    %v1771 = vmul.f32 %v1707, %v1770
    %vm1772 = vcmp.eq.s32.totalorder %v59, 0
    %v1773 = vadd.f32 %v1690, 0.0
    %v1774 = vadd.f32 %v1691, 0.0
    %vm1775 = vcmask 15368
    %v1776 = vsel %vm1775, %v1773, 0.0
    %v1777 = vsel %vm1775, %v1774, 0.0
    %v1778 = vadd.f32 %v1776, %v1777
    %v1779 = vrot.slane %v1778, 4
    %v1780 = vadd.f32 %v1778, %v1779
    %v1781 = vrot.slane %v1780, 2
    %v1782 = vadd.f32 %v1780, %v1781
    %v1783 = vrot.slane %v1782, 1
    %v1784 = vadd.f32 %v1782, %v1783
    %1786 = vset.pattern.permute.xlu0 1
    %1787 = vperm.xlu0 %1786, %v1784
    %v1788 = vpop.permute.xlu0 %1787
    %v1790 = vsel %vm1772, %v1788, 0.0
    %vm1791 = vcmp.eq.s32.totalorder %v59, 1
    %1792 = vadd.xlane.f32.xlu0 %v1702
    %v1793 = vpop.xlane.xlu0 %1792
    %1794 = vadd.xlane.f32.xlu0 %v1703
    %v1795 = vpop.xlane.xlu0 %1794
    %v1796 = vadd.f32 %v1793, %v1795
    %v1797 = vrot.slane %v1796, 4
    %v1798 = vadd.f32 %v1796, %v1797
    %v1799 = vrot.slane %v1798, 2
    %v1800 = vadd.f32 %v1798, %v1799
    %v1801 = vrot.slane %v1800, 1
    %v1802 = vadd.f32 %v1800, %v1801
    %v1803 = vsel %vm1791, %v1802, 0.0
    %v1804 = vadd.f32 %v1790, %v1803
    %vm1805 = vcmp.eq.s32.totalorder %v59, 2
    %1806 = vadd.xlane.f32.xlu0 %v1706
    %v1807 = vpop.xlane.xlu0 %1806
    %1808 = vadd.xlane.f32.xlu0 %v1707
    %v1809 = vpop.xlane.xlu0 %1808
    %v1810 = vadd.f32 %v1807, %v1809
    %v1811 = vrot.slane %v1810, 4
    %v1812 = vadd.f32 %v1810, %v1811
    %v1813 = vrot.slane %v1812, 2
    %v1814 = vadd.f32 %v1812, %v1813
    %v1815 = vrot.slane %v1814, 1
    %v1816 = vadd.f32 %v1814, %v1815
    %v1817 = vsel %vm1805, %v1816, 0.0
    %v1818 = vadd.f32 %v1804, %v1817
    %vm1819 = vcmp.eq.s32.totalorder %v59, 3
    %1820 = vadd.xlane.f32.xlu0 %v1708
    %v1821 = vpop.xlane.xlu0 %1820
    %1822 = vadd.xlane.f32.xlu0 %v1709
    %v1823 = vpop.xlane.xlu0 %1822
    %v1824 = vadd.f32 %v1821, %v1823
    %v1825 = vrot.slane %v1824, 4
    %v1826 = vadd.f32 %v1824, %v1825
    %v1827 = vrot.slane %v1826, 2
    %v1828 = vadd.f32 %v1826, %v1827
    %v1829 = vrot.slane %v1828, 1
    %v1830 = vadd.f32 %v1828, %v1829
    %v1831 = vsel %vm1819, %v1830, 0.0
    %v1832 = vadd.f32 %v1818, %v1831
    %vm1833 = vcmp.eq.s32.totalorder %v59, 4
    %1834 = vadd.xlane.f32.xlu0 %v1756
    %v1835 = vpop.xlane.xlu0 %1834
    %1836 = vadd.xlane.f32.xlu0 %v1771
    %v1837 = vpop.xlane.xlu0 %1836
    %v1838 = vadd.f32 %v1835, %v1837
    %v1839 = vrot.slane %v1838, 4
    %v1840 = vadd.f32 %v1838, %v1839
    %v1841 = vrot.slane %v1840, 2
    %v1842 = vadd.f32 %v1840, %v1841
    %v1843 = vrot.slane %v1842, 1
    %v1844 = vadd.f32 %v1842, %v1843
    %v1845 = vsel %vm1833, %v1844, 0.0
    %v1846 = vadd.f32 %v1832, %v1845
    %1847 = vst [vmem:[%s7] sm:$0x1] %v1846
    // Predicated region
    $region34: #{_bet_forward.1} parent=1 // pred_check
      _
    $region35: #{_bet_forward.1} parent=1 // pred_check_branch
      %1849 = sbr.rel (0) target = $region37
    $region36: #{_bet_forward.1} parent=1 // pred_region
      _
    $region37: #{_bet_forward.1} parent=1 // pred_fallthru
      _
    // Predicated region
    $region38: #{_bet_forward.1} parent=1 // pred_check
      _
    $region39: #{_bet_forward.1} parent=1 // pred_check_branch
      %1851 = sbr.rel (0) target = $region41
    $region40: #{_bet_forward.1} parent=1 // pred_region
      _
    $region41: #{_bet_forward.1} parent=1 // pred_fallthru
      _
    // Predicated region
    $region42: #{_bet_forward.1} parent=1 // pred_check
      _
    $region43: #{_bet_forward.1} parent=1 // pred_check_branch
      %1853 = sbr.rel (0) target = $region45
    $region44: #{_bet_forward.1} parent=1 // pred_region
      _
    $region45: #{_bet_forward.1} parent=1 // pred_fallthru
      _
    // Predicated region
    $region46: #{_bet_forward.1} parent=1 // pred_check
      _
    $region47: #{_bet_forward.1} parent=1 // pred_check_branch
      %1855 = sbr.rel (0) target = $region49
    $region48: #{_bet_forward.1} parent=1 // pred_region
      _
    $region49: #{_bet_forward.1} parent=1 // pred_fallthru
      _
    %1856 = vsyncpa [#allocation3], 1
    %1857 = vsyncpa [#allocation5], 1

</llo_original>
